<compile_context>
chip_gen: v7x
topology: tpu7x:2x2x1
jax: 0.10.0
libtpu: 0.0.40
codegen_flags: <defaults>
</compile_context>

<pallas_src>
import functools

import jax
import jax.numpy as jnp
from jax import lax
from jax.experimental import pallas as pl
from jax.experimental.pallas import tpu as pltpu


# ---------------------------------------------------------------------------
# Fused Stem kernel (channel-major, one batch image per grid step)
# ---------------------------------------------------------------------------

def _stem_kernel(phases_ref, masks_ref, w1_ref, b1_ref, wa_ref, ba_ref,
                 wdw_ref, bdw_ref, wf_ref, bfb_ref, o_ref, *, Wo, S, bf_ch):
    phases = phases_ref[...]                       # (4*Cin, S) parity planes
    masks = masks_ref[...]                         # (12, S) boundary masks

    # ---- conv1 (3x3, stride 2, pad 1) + BN + ReLU via parity-phase groups.
    # Group lane-shifts {0, 1, Wo, Wo+1} cover all 9 stride-2 taps; invalid
    # (plane, group) combinations have zero weight columns in w1_ref.
    g0 = phases
    g1 = pltpu.roll(phases, shift=1, axis=1) * masks[0:1, :]        # needs ow-1
    g2 = pltpu.roll(phases, shift=Wo, axis=1) * masks[1:2, :]       # needs oh-1
    g3 = pltpu.roll(phases, shift=Wo + 1, axis=1) * masks[2:3, :]   # needs both
    xcol = jnp.concatenate([g0, g1, g2, g3], axis=0)                # (16*Cin, S)
    feat = jnp.dot(w1_ref[...], xcol, preferred_element_type=jnp.float32)
    feat = jnp.maximum(feat + b1_ref[...], 0.0)                     # (mid, S)

    x1 = feat[:bf_ch, :]                           # identity branch (>= 0)
    x2 = feat[bf_ch:, :]                           # branch2 input

    # ---- branch2[0]: 1x1 conv + BN + ReLU (BN scale folded into weights).
    act = jnp.dot(wa_ref[...], x2, preferred_element_type=jnp.float32)
    act = jnp.maximum(act + ba_ref[...], 0.0)                       # (bf, S)

    # ---- branch2[1]: depthwise 3x3 + BN.  Shifts on the XLU (pltpu.roll),
    # zero-padding of the conv input via precomputed per-tap masks, VPU FMAs.
    wdw = wdw_ref[...]                                              # (bf, 9)
    acc = act * wdw[:, 4:5]                                         # center tap
    for dh in range(3):
        for dw in range(3):
            if dh == 1 and dw == 1:
                continue
            k = dh * 3 + dw
            off = (dh - 1) * Wo + (dw - 1)
            shifted = pltpu.roll(act, shift=(-off) % S, axis=1)
            acc = acc + shifted * masks[3 + k:4 + k, :] * wdw[:, k:k + 1]
    acc = acc + bdw_ref[...]

    # ---- branch2[2]: 1x1 conv + BN + ReLU fused with the identity-branch
    # concat and channel_shuffle(groups=2): one matmul whose even output rows
    # scatter x1 and odd rows apply the (shuffled) 1x1 weights.  Valid because
    # x1 >= 0 (post conv1 ReLU) and the two row blocks are disjoint.
    z = jnp.concatenate([acc, x1], axis=0)                          # (2*bf, S)
    y = jnp.dot(wf_ref[...], z, preferred_element_type=jnp.float32)
    o_ref[...] = jnp.maximum(y + bfb_ref[...], 0.0)                 # (2*bf, S)


# ---------------------------------------------------------------------------
# Wrapper: layout plumbing + BN / shuffle folding, then one pallas_call
# ---------------------------------------------------------------------------

@jax.jit
def stem_forward(x_nchw, p):
    x = x_nchw.astype(jnp.float32)
    B, Cin, H, W = x.shape
    # TODO(synk): odd H/W (ceil stride-2 output) and spatial tiling with halos
    # for images too large for VMEM are not handled; full image per grid step.
    assert H % 2 == 0 and W % 2 == 0
    Ho, Wo = H // 2, W // 2
    S = Ho * Wo                           # flat spatial axis (lanes in-kernel)
    mid = p["w1"].shape[-1]
    bf_ch = mid // 2

    # Single input relayout (layout plumbing): parity-phase split so stride-2
    # taps become lane rolls.  phases[b, (py*2+px)*Cin + c, oh*Wo+ow]
    #   = x[b, c, 2*oh+py, 2*ow+px]
    phases = x.reshape(B, Cin, Ho, 2, Wo, 2).transpose(0, 3, 5, 1, 2, 4)
    phases = phases.reshape(B, 4 * Cin, S)

    # Boundary masks (rows: not_left, not_top, not_topleft, then 9 dw-tap masks)
    idx = jnp.arange(S, dtype=jnp.int32)
    oh, ow = idx // Wo, idx % Wo
    not_left = (ow > 0).astype(jnp.float32)
    not_top = (oh > 0).astype(jnp.float32)
    not_right = (ow < Wo - 1).astype(jnp.float32)
    not_bot = (oh < Ho - 1).astype(jnp.float32)
    rows = [not_left, not_top, not_top * not_left]
    for dh in range(3):
        for dw in range(3):
            m = jnp.ones((S,), jnp.float32)
            if dh == 0:
                m = m * not_top
            if dh == 2:
                m = m * not_bot
            if dw == 0:
                m = m * not_left
            if dw == 2:
                m = m * not_right
            rows.append(m)
    masks = jnp.stack(rows, axis=0)                                  # (12, S)

    # conv1 weights: (mid, 4 groups * 4 phase planes * Cin), BN scale folded.
    scale1 = p["bn1_scale"].reshape(mid)
    blocks = []
    for a, b in ((0, 0), (0, -1), (-1, 0), (-1, -1)):                # group shifts
        for py in range(2):
            for px in range(2):
                if (a == -1 and py == 0) or (b == -1 and px == 0):
                    blocks.append(jnp.zeros((mid, Cin), jnp.float32))
                else:
                    dh = 1 if py == 0 else (0 if a == -1 else 2)
                    dw = 1 if px == 0 else (0 if b == -1 else 2)
                    blocks.append(p["w1"][dh, dw, :, :].T * scale1[:, None])
    w1big = jnp.concatenate(blocks, axis=1)                          # (mid, 16*Cin)
    b1 = p["bn1_bias"].reshape(mid, 1)

    # branch2 weights, channel-major, BN folded.
    wa = p["w_a"].T * p["scale_a"].reshape(bf_ch, 1)                 # (bf, bf)
    ba = p["bias_a"].reshape(bf_ch, 1)
    wdw = (p["w_dw"] * p["scale_dw"].reshape(1, 1, bf_ch)).reshape(9, bf_ch).T
    bdw = p["bias_dw"].reshape(bf_ch, 1)

    # Final 1x1 conv + identity scatter + channel_shuffle(2) in one matrix:
    # out[2j] = x1[j], out[2j+1] = relu(<dw_out, w_c[:, j]> * scale_c + bias_c).
    wc = p["w_c"].T * p["scale_c"].reshape(bf_ch, 1)                 # (bf, bf)
    eye = jnp.eye(bf_ch, dtype=jnp.float32)
    zero = jnp.zeros((bf_ch, bf_ch), jnp.float32)
    top = jnp.concatenate([zero, eye], axis=1)                       # even rows
    bot = jnp.concatenate([wc, zero], axis=1)                        # odd rows
    wf = jnp.stack([top, bot], axis=1).reshape(2 * bf_ch, 2 * bf_ch)
    bfb = jnp.stack([jnp.zeros((bf_ch,), jnp.float32),
                     p["bias_c"].reshape(bf_ch)], axis=1).reshape(2 * bf_ch, 1)

    kernel = functools.partial(_stem_kernel, Wo=Wo, S=S, bf_ch=bf_ch)
    out = pl.pallas_call(
        kernel,
        out_shape=jax.ShapeDtypeStruct((B, 2 * bf_ch, S), jnp.float32),
        grid=(B,),                     # >= 2 "parallel" steps -> both v7x cores
        in_specs=[
            pl.BlockSpec((None, 4 * Cin, S), lambda b: (b, 0, 0)),   # phases
            pl.BlockSpec((12, S), lambda b: (0, 0)),                 # masks
            pl.BlockSpec((mid, 16 * Cin), lambda b: (0, 0)),         # w1 (folded)
            pl.BlockSpec((mid, 1), lambda b: (0, 0)),                # bn1 bias
            pl.BlockSpec((bf_ch, bf_ch), lambda b: (0, 0)),          # w_a (folded)
            pl.BlockSpec((bf_ch, 1), lambda b: (0, 0)),              # bias_a
            pl.BlockSpec((bf_ch, 9), lambda b: (0, 0)),              # w_dw (folded)
            pl.BlockSpec((bf_ch, 1), lambda b: (0, 0)),              # bias_dw
            pl.BlockSpec((2 * bf_ch, 2 * bf_ch), lambda b: (0, 0)),  # fused final W
            pl.BlockSpec((2 * bf_ch, 1), lambda b: (0, 0)),          # fused final b
        ],
        out_specs=pl.BlockSpec((None, 2 * bf_ch, S), lambda b: (b, 0, 0)),
        compiler_params=pltpu.CompilerParams(dimension_semantics=("parallel",)),
    )(phases, masks, w1big, b1, wa, ba, wdw, bdw, wf, bfb)

    # Output is already in channel-shuffled NCHW order; reshape is metadata-only.
    return out.reshape(B, 2 * bf_ch, Ho, Wo)


# ---------------------------------------------------------------------------
# Pure-jnp reference (independent path: lax.conv) and deterministic params
# ---------------------------------------------------------------------------

def reference_forward(x_nchw, p):
    x = jnp.transpose(x_nchw, (0, 2, 3, 1)).astype(jnp.float32)
    mid = p["w1"].shape[-1]
    bf = mid // 2
    f = lax.conv_general_dilated(x, p["w1"], (2, 2), ((1, 1), (1, 1)),
                                 dimension_numbers=("NHWC", "HWIO", "NHWC"))
    f = jnp.maximum(f * p["bn1_scale"] + p["bn1_bias"], 0.0)
    x1, x2 = f[..., :bf], f[..., bf:]
    a = jnp.maximum((x2 @ p["w_a"]) * p["scale_a"] + p["bias_a"], 0.0)
    dw = lax.conv_general_dilated(a, p["w_dw"].reshape(3, 3, 1, bf), (1, 1),
                                  ((1, 1), (1, 1)),
                                  dimension_numbers=("NHWC", "HWIO", "NHWC"),
                                  feature_group_count=bf)
    dw = dw * p["scale_dw"] + p["bias_dw"]
    y2 = jnp.maximum((dw @ p["w_c"]) * p["scale_c"] + p["bias_c"], 0.0)
    cat = jnp.concatenate([x1, y2], axis=-1)
    B, Ho, Wo, _ = cat.shape
    out = cat.reshape(B, Ho, Wo, 2, bf).transpose(0, 1, 2, 4, 3)   # channel shuffle
    out = out.reshape(B, Ho, Wo, 2 * bf)
    return jnp.transpose(out, (0, 3, 1, 2))


def init_params(key, in_ch, mid_ch):
    """Deterministic weights; BN (inference mode) folded into scale/bias."""
    bf = mid_ch // 2
    ks = jax.random.split(key, 8)

    def kaiming(k, shape, fan_in):
        return jax.random.normal(k, shape, jnp.float32) / jnp.sqrt(float(fan_in))

    def bn(k, c, eps=1e-5):
        k1, k2, k3, k4 = jax.random.split(k, 4)
        gamma = 1.0 + 0.1 * jax.random.normal(k1, (c,), jnp.float32)
        beta = 0.1 * jax.random.normal(k2, (c,), jnp.float32)
        mean = 0.1 * jax.random.normal(k3, (c,), jnp.float32)
        var = 1.0 + 0.1 * jnp.abs(jax.random.normal(k4, (c,), jnp.float32))
        scale = gamma / jnp.sqrt(var + eps)
        bias = beta - mean * scale
        return scale.reshape(1, c), bias.reshape(1, c)

    p = {}
    p["w1"] = kaiming(ks[0], (3, 3, in_ch, mid_ch), 9 * in_ch)       # HWIO
    p["bn1_scale"], p["bn1_bias"] = bn(ks[1], mid_ch)
    p["w_a"] = kaiming(ks[2], (bf, bf), bf)                          # branch2 1x1 #1
    p["scale_a"], p["bias_a"] = bn(ks[3], bf)
    p["w_dw"] = kaiming(ks[4], (3, 3, bf), 9)                        # depthwise 3x3
    p["scale_dw"], p["bias_dw"] = bn(ks[5], bf)
    p["w_c"] = kaiming(ks[6], (bf, bf), bf)                          # branch2 1x1 #2
    p["scale_c"], p["bias_c"] = bn(ks[7], bf)
    return p


# ---------------------------------------------------------------------------

if __name__ == "__main__":
    B, Cin, H, W = 2, 4, 32, 32
    mid_channels = out_channels = 32   # ShuffleUnit(stride=1) requires mid == out

    key = jax.random.PRNGKey(0)
    kx, kp = jax.random.split(key)
    x = jax.random.normal(kx, (B, Cin, H, W), jnp.float32)           # NCHW input
    params = init_params(kp, Cin, mid_channels)

    out = jax.block_until_ready(stem_forward(x, params))
    ref = reference_forward(x, params)

    assert out.shape == (B, out_channels, H // 2, W // 2), out.shape
    err = float(jnp.max(jnp.abs(out - ref)))
    assert err < 1e-4, err
    print("KERNEL_OK")
</pallas_src>

<mosaic_0001>
module attributes {stable_mosaic.version = 11 : i64} {
  func.func @_stem_kernel(%arg0: i32, %arg1: memref<1x16x256xf32, #tpu.memory_space<vmem>>, %arg2: memref<12x256xf32, #tpu.memory_space<vmem>>, %arg3: memref<32x64xf32, #tpu.memory_space<vmem>>, %arg4: memref<32x1xf32, #tpu.memory_space<vmem>>, %arg5: memref<16x16xf32, #tpu.memory_space<vmem>>, %arg6: memref<16x1xf32, #tpu.memory_space<vmem>>, %arg7: memref<16x9xf32, #tpu.memory_space<vmem>>, %arg8: memref<16x1xf32, #tpu.memory_space<vmem>>, %arg9: memref<32x32xf32, #tpu.memory_space<vmem>>, %arg10: memref<32x1xf32, #tpu.memory_space<vmem>>, %arg11: memref<1x32x256xf32, #tpu.memory_space<vmem>>) attributes {dimension_semantics = [#tpu.dimension_semantics<parallel>], iteration_bounds = array<i64: 2>, scalar_prefetch = 0 : i64, scratch_operands = 0 : i64, tpu.core_type = #tpu.core_type<tc>, window_params = [{transform_indices = @transform_0, window_bounds = array<i64: 1, 16, 256>}, {pipeline_mode = #tpu.pipeline_mode<synchronous>, transform_indices = @transform_1, window_bounds = array<i64: 12, 256>}, {pipeline_mode = #tpu.pipeline_mode<synchronous>, transform_indices = @transform_2, window_bounds = array<i64: 32, 64>}, {pipeline_mode = #tpu.pipeline_mode<synchronous>, transform_indices = @transform_3, window_bounds = array<i64: 32, 1>}, {pipeline_mode = #tpu.pipeline_mode<synchronous>, transform_indices = @transform_4, window_bounds = array<i64: 16, 16>}, {pipeline_mode = #tpu.pipeline_mode<synchronous>, transform_indices = @transform_5, window_bounds = array<i64: 16, 1>}, {pipeline_mode = #tpu.pipeline_mode<synchronous>, transform_indices = @transform_6, window_bounds = array<i64: 16, 9>}, {pipeline_mode = #tpu.pipeline_mode<synchronous>, transform_indices = @transform_7, window_bounds = array<i64: 16, 1>}, {pipeline_mode = #tpu.pipeline_mode<synchronous>, transform_indices = @transform_8, window_bounds = array<i64: 32, 32>}, {pipeline_mode = #tpu.pipeline_mode<synchronous>, transform_indices = @transform_9, window_bounds = array<i64: 32, 1>}, {transform_indices = @transform_10, window_bounds = array<i64: 1, 32, 256>}]} {
    %c0 = arith.constant 0 : index
    %c0_0 = arith.constant 0 : index
    %c0_1 = arith.constant 0 : index
    %0 = vector.load %arg1[%c0, %c0_0, %c0_1] : memref<1x16x256xf32, #tpu.memory_space<vmem>>, vector<1x16x256xf32>
    %1 = vector.shape_cast %0 : vector<1x16x256xf32> to vector<16x256xf32>
    %c0_2 = arith.constant 0 : index
    %c0_3 = arith.constant 0 : index
    %2 = vector.load %arg2[%c0_2, %c0_3] : memref<12x256xf32, #tpu.memory_space<vmem>>, vector<12x256xf32>
    %c1_i32 = arith.constant 1 : i32
    %3 = tpu.dynamic_rotate %1 by %c1_i32 dim 1 : vector<16x256xf32>, i32 -> vector<16x256xf32>
    %4 = vector.extract_strided_slice %2 {offsets = [0, 0], sizes = [1, 256], strides = [1, 1]} : vector<12x256xf32> to vector<1x256xf32>
    %5 = vector.broadcast %4 : vector<1x256xf32> to vector<16x256xf32>
    %6 = arith.mulf %3, %5 : vector<16x256xf32>
    %c16_i32 = arith.constant 16 : i32
    %7 = tpu.dynamic_rotate %1 by %c16_i32 dim 1 : vector<16x256xf32>, i32 -> vector<16x256xf32>
    %8 = vector.extract_strided_slice %2 {offsets = [1, 0], sizes = [1, 256], strides = [1, 1]} : vector<12x256xf32> to vector<1x256xf32>
    %9 = vector.broadcast %8 : vector<1x256xf32> to vector<16x256xf32>
    %10 = arith.mulf %7, %9 : vector<16x256xf32>
    %c17_i32 = arith.constant 17 : i32
    %11 = tpu.dynamic_rotate %1 by %c17_i32 dim 1 : vector<16x256xf32>, i32 -> vector<16x256xf32>
    %12 = vector.extract_strided_slice %2 {offsets = [2, 0], sizes = [1, 256], strides = [1, 1]} : vector<12x256xf32> to vector<1x256xf32>
    %13 = vector.broadcast %12 : vector<1x256xf32> to vector<16x256xf32>
    %14 = arith.mulf %11, %13 : vector<16x256xf32>
    %15 = tpu.concatenate %1, %6, %10, %14 in 0 : vector<16x256xf32>, vector<16x256xf32>, vector<16x256xf32>, vector<16x256xf32> -> vector<64x256xf32>
    %c0_4 = arith.constant 0 : index
    %c0_5 = arith.constant 0 : index
    %16 = vector.load %arg3[%c0_4, %c0_5] : memref<32x64xf32, #tpu.memory_space<vmem>>, vector<32x64xf32>
    %cst = arith.constant dense<0.000000e+00> : vector<32x256xf32>
    %17 = tpu.matmul %16, %15, %cst {dimension_numbers = #tpu.dot_dimension_numbers<[1], [0], [0], [1], [0, 0, 1, 1], [], []>} : vector<32x64xf32>, vector<64x256xf32>, vector<32x256xf32> -> vector<32x256xf32>
    %c0_6 = arith.constant 0 : index
    %c0_7 = arith.constant 0 : index
    %18 = vector.load %arg4[%c0_6, %c0_7] : memref<32x1xf32, #tpu.memory_space<vmem>>, vector<32x1xf32>
    %19 = vector.broadcast %18 : vector<32x1xf32> to vector<32x256xf32>
    %20 = arith.addf %17, %19 : vector<32x256xf32>
    %cst_8 = arith.constant 0.000000e+00 : f32
    %21 = vector.broadcast %cst_8 : f32 to vector<32x256xf32>
    %22 = arith.maximumf %20, %21 : vector<32x256xf32>
    %23 = vector.extract_strided_slice %22 {offsets = [0, 0], sizes = [16, 256], strides = [1, 1]} : vector<32x256xf32> to vector<16x256xf32>
    %24 = vector.extract_strided_slice %22 {offsets = [16, 0], sizes = [16, 256], strides = [1, 1]} : vector<32x256xf32> to vector<16x256xf32>
    %c0_9 = arith.constant 0 : index
    %c0_10 = arith.constant 0 : index
    %25 = vector.load %arg5[%c0_9, %c0_10] : memref<16x16xf32, #tpu.memory_space<vmem>>, vector<16x16xf32>
    %cst_11 = arith.constant dense<0.000000e+00> : vector<16x256xf32>
    %26 = tpu.matmul %25, %24, %cst_11 {dimension_numbers = #tpu.dot_dimension_numbers<[1], [0], [0], [1], [0, 0, 1, 1], [], []>} : vector<16x16xf32>, vector<16x256xf32>, vector<16x256xf32> -> vector<16x256xf32>
    %c0_12 = arith.constant 0 : index
    %c0_13 = arith.constant 0 : index
    %27 = vector.load %arg6[%c0_12, %c0_13] : memref<16x1xf32, #tpu.memory_space<vmem>>, vector<16x1xf32>
    %28 = vector.broadcast %27 : vector<16x1xf32> to vector<16x256xf32>
    %29 = arith.addf %26, %28 : vector<16x256xf32>
    %cst_14 = arith.constant 0.000000e+00 : f32
    %30 = vector.broadcast %cst_14 : f32 to vector<16x256xf32>
    %31 = arith.maximumf %29, %30 : vector<16x256xf32>
    %c0_15 = arith.constant 0 : index
    %c0_16 = arith.constant 0 : index
    %32 = vector.load %arg7[%c0_15, %c0_16] : memref<16x9xf32, #tpu.memory_space<vmem>>, vector<16x9xf32>
    %33 = vector.extract_strided_slice %32 {offsets = [0, 4], sizes = [16, 1], strides = [1, 1]} : vector<16x9xf32> to vector<16x1xf32>
    %34 = vector.broadcast %33 : vector<16x1xf32> to vector<16x256xf32>
    %35 = arith.mulf %31, %34 : vector<16x256xf32>
    %c17_i32_17 = arith.constant 17 : i32
    %36 = tpu.dynamic_rotate %31 by %c17_i32_17 dim 1 : vector<16x256xf32>, i32 -> vector<16x256xf32>
    %37 = vector.extract_strided_slice %2 {offsets = [3, 0], sizes = [1, 256], strides = [1, 1]} : vector<12x256xf32> to vector<1x256xf32>
    %38 = vector.broadcast %37 : vector<1x256xf32> to vector<16x256xf32>
    %39 = arith.mulf %36, %38 : vector<16x256xf32>
    %40 = vector.extract_strided_slice %32 {offsets = [0, 0], sizes = [16, 1], strides = [1, 1]} : vector<16x9xf32> to vector<16x1xf32>
    %41 = vector.broadcast %40 : vector<16x1xf32> to vector<16x256xf32>
    %42 = arith.mulf %39, %41 : vector<16x256xf32>
    %43 = arith.addf %35, %42 : vector<16x256xf32>
    %c16_i32_18 = arith.constant 16 : i32
    %44 = tpu.dynamic_rotate %31 by %c16_i32_18 dim 1 : vector<16x256xf32>, i32 -> vector<16x256xf32>
    %45 = vector.extract_strided_slice %2 {offsets = [4, 0], sizes = [1, 256], strides = [1, 1]} : vector<12x256xf32> to vector<1x256xf32>
    %46 = vector.broadcast %45 : vector<1x256xf32> to vector<16x256xf32>
    %47 = arith.mulf %44, %46 : vector<16x256xf32>
    %48 = vector.extract_strided_slice %32 {offsets = [0, 1], sizes = [16, 1], strides = [1, 1]} : vector<16x9xf32> to vector<16x1xf32>
    %49 = vector.broadcast %48 : vector<16x1xf32> to vector<16x256xf32>
    %50 = arith.mulf %47, %49 : vector<16x256xf32>
    %51 = arith.addf %43, %50 : vector<16x256xf32>
    %c15_i32 = arith.constant 15 : i32
    %52 = tpu.dynamic_rotate %31 by %c15_i32 dim 1 : vector<16x256xf32>, i32 -> vector<16x256xf32>
    %53 = vector.extract_strided_slice %2 {offsets = [5, 0], sizes = [1, 256], strides = [1, 1]} : vector<12x256xf32> to vector<1x256xf32>
    %54 = vector.broadcast %53 : vector<1x256xf32> to vector<16x256xf32>
    %55 = arith.mulf %52, %54 : vector<16x256xf32>
    %56 = vector.extract_strided_slice %32 {offsets = [0, 2], sizes = [16, 1], strides = [1, 1]} : vector<16x9xf32> to vector<16x1xf32>
    %57 = vector.broadcast %56 : vector<16x1xf32> to vector<16x256xf32>
    %58 = arith.mulf %55, %57 : vector<16x256xf32>
    %59 = arith.addf %51, %58 : vector<16x256xf32>
    %c1_i32_19 = arith.constant 1 : i32
    %60 = tpu.dynamic_rotate %31 by %c1_i32_19 dim 1 : vector<16x256xf32>, i32 -> vector<16x256xf32>
    %61 = vector.extract_strided_slice %2 {offsets = [6, 0], sizes = [1, 256], strides = [1, 1]} : vector<12x256xf32> to vector<1x256xf32>
    %62 = vector.broadcast %61 : vector<1x256xf32> to vector<16x256xf32>
    %63 = arith.mulf %60, %62 : vector<16x256xf32>
    %64 = vector.extract_strided_slice %32 {offsets = [0, 3], sizes = [16, 1], strides = [1, 1]} : vector<16x9xf32> to vector<16x1xf32>
    %65 = vector.broadcast %64 : vector<16x1xf32> to vector<16x256xf32>
    %66 = arith.mulf %63, %65 : vector<16x256xf32>
    %67 = arith.addf %59, %66 : vector<16x256xf32>
    %c255_i32 = arith.constant 255 : i32
    %68 = tpu.dynamic_rotate %31 by %c255_i32 dim 1 : vector<16x256xf32>, i32 -> vector<16x256xf32>
    %69 = vector.extract_strided_slice %2 {offsets = [8, 0], sizes = [1, 256], strides = [1, 1]} : vector<12x256xf32> to vector<1x256xf32>
    %70 = vector.broadcast %69 : vector<1x256xf32> to vector<16x256xf32>
    %71 = arith.mulf %68, %70 : vector<16x256xf32>
    %72 = vector.extract_strided_slice %32 {offsets = [0, 5], sizes = [16, 1], strides = [1, 1]} : vector<16x9xf32> to vector<16x1xf32>
    %73 = vector.broadcast %72 : vector<16x1xf32> to vector<16x256xf32>
    %74 = arith.mulf %71, %73 : vector<16x256xf32>
    %75 = arith.addf %67, %74 : vector<16x256xf32>
    %c241_i32 = arith.constant 241 : i32
    %76 = tpu.dynamic_rotate %31 by %c241_i32 dim 1 : vector<16x256xf32>, i32 -> vector<16x256xf32>
    %77 = vector.extract_strided_slice %2 {offsets = [9, 0], sizes = [1, 256], strides = [1, 1]} : vector<12x256xf32> to vector<1x256xf32>
    %78 = vector.broadcast %77 : vector<1x256xf32> to vector<16x256xf32>
    %79 = arith.mulf %76, %78 : vector<16x256xf32>
    %80 = vector.extract_strided_slice %32 {offsets = [0, 6], sizes = [16, 1], strides = [1, 1]} : vector<16x9xf32> to vector<16x1xf32>
    %81 = vector.broadcast %80 : vector<16x1xf32> to vector<16x256xf32>
    %82 = arith.mulf %79, %81 : vector<16x256xf32>
    %83 = arith.addf %75, %82 : vector<16x256xf32>
    %c240_i32 = arith.constant 240 : i32
    %84 = tpu.dynamic_rotate %31 by %c240_i32 dim 1 : vector<16x256xf32>, i32 -> vector<16x256xf32>
    %85 = vector.extract_strided_slice %2 {offsets = [10, 0], sizes = [1, 256], strides = [1, 1]} : vector<12x256xf32> to vector<1x256xf32>
    %86 = vector.broadcast %85 : vector<1x256xf32> to vector<16x256xf32>
    %87 = arith.mulf %84, %86 : vector<16x256xf32>
    %88 = vector.extract_strided_slice %32 {offsets = [0, 7], sizes = [16, 1], strides = [1, 1]} : vector<16x9xf32> to vector<16x1xf32>
    %89 = vector.broadcast %88 : vector<16x1xf32> to vector<16x256xf32>
    %90 = arith.mulf %87, %89 : vector<16x256xf32>
    %91 = arith.addf %83, %90 : vector<16x256xf32>
    %c239_i32 = arith.constant 239 : i32
    %92 = tpu.dynamic_rotate %31 by %c239_i32 dim 1 : vector<16x256xf32>, i32 -> vector<16x256xf32>
    %93 = vector.extract_strided_slice %2 {offsets = [11, 0], sizes = [1, 256], strides = [1, 1]} : vector<12x256xf32> to vector<1x256xf32>
    %94 = vector.broadcast %93 : vector<1x256xf32> to vector<16x256xf32>
    %95 = arith.mulf %92, %94 : vector<16x256xf32>
    %96 = vector.extract_strided_slice %32 {offsets = [0, 8], sizes = [16, 1], strides = [1, 1]} : vector<16x9xf32> to vector<16x1xf32>
    %97 = vector.broadcast %96 : vector<16x1xf32> to vector<16x256xf32>
    %98 = arith.mulf %95, %97 : vector<16x256xf32>
    %99 = arith.addf %91, %98 : vector<16x256xf32>
    %c0_20 = arith.constant 0 : index
    %c0_21 = arith.constant 0 : index
    %100 = vector.load %arg8[%c0_20, %c0_21] : memref<16x1xf32, #tpu.memory_space<vmem>>, vector<16x1xf32>
    %101 = vector.broadcast %100 : vector<16x1xf32> to vector<16x256xf32>
    %102 = arith.addf %99, %101 : vector<16x256xf32>
    %103 = tpu.concatenate %102, %23 in 0 : vector<16x256xf32>, vector<16x256xf32> -> vector<32x256xf32>
    %c0_22 = arith.constant 0 : index
    %c0_23 = arith.constant 0 : index
    %104 = vector.load %arg9[%c0_22, %c0_23] : memref<32x32xf32, #tpu.memory_space<vmem>>, vector<32x32xf32>
    %cst_24 = arith.constant dense<0.000000e+00> : vector<32x256xf32>
    %105 = tpu.matmul %104, %103, %cst_24 {dimension_numbers = #tpu.dot_dimension_numbers<[1], [0], [0], [1], [0, 0, 1, 1], [], []>} : vector<32x32xf32>, vector<32x256xf32>, vector<32x256xf32> -> vector<32x256xf32>
    %c0_25 = arith.constant 0 : index
    %c0_26 = arith.constant 0 : index
    %106 = vector.load %arg10[%c0_25, %c0_26] : memref<32x1xf32, #tpu.memory_space<vmem>>, vector<32x1xf32>
    %107 = vector.broadcast %106 : vector<32x1xf32> to vector<32x256xf32>
    %108 = arith.addf %105, %107 : vector<32x256xf32>
    %cst_27 = arith.constant 0.000000e+00 : f32
    %109 = vector.broadcast %cst_27 : f32 to vector<32x256xf32>
    %110 = arith.maximumf %108, %109 : vector<32x256xf32>
    %c0_28 = arith.constant 0 : index
    %c0_29 = arith.constant 0 : index
    %c0_30 = arith.constant 0 : index
    %111 = vector.load %arg11[%c0_28, %c0_29, %c0_30] : memref<1x32x256xf32, #tpu.memory_space<vmem>>, vector<1x32x256xf32>
    %112 = vector.shape_cast %111 : vector<1x32x256xf32> to vector<32x256xf32>
    %113 = vector.shape_cast %110 : vector<32x256xf32> to vector<1x32x256xf32>
    tpu.vector_store %arg11[%c0_28, %c0_29, %c0_30], %113 {strides = array<i32>} : memref<1x32x256xf32, #tpu.memory_space<vmem>>, vector<1x32x256xf32>,
    return
  }
  func.func @transform_0(%arg0: i32) -> (i32, i32, i32) {
    %c0_i32 = arith.constant 0 : i32
    %c0_i32_0 = arith.constant 0 : i32
    %c0_i32_1 = arith.constant 0 : i32
    return %arg0, %c0_i32, %c0_i32_0 : i32, i32, i32
  }
  func.func @transform_1(%arg0: i32) -> (i32, i32) {
    %c0_i32 = arith.constant 0 : i32
    %c0_i32_0 = arith.constant 0 : i32
    %c0_i32_1 = arith.constant 0 : i32
    return %c0_i32, %c0_i32_0 : i32, i32
  }
  func.func @transform_2(%arg0: i32) -> (i32, i32) {
    %c0_i32 = arith.constant 0 : i32
    %c0_i32_0 = arith.constant 0 : i32
    %c0_i32_1 = arith.constant 0 : i32
    return %c0_i32, %c0_i32_0 : i32, i32
  }
  func.func @transform_3(%arg0: i32) -> (i32, i32) {
    %c0_i32 = arith.constant 0 : i32
    %c0_i32_0 = arith.constant 0 : i32
    %c0_i32_1 = arith.constant 0 : i32
    return %c0_i32, %c0_i32_0 : i32, i32
  }
  func.func @transform_4(%arg0: i32) -> (i32, i32) {
    %c0_i32 = arith.constant 0 : i32
    %c0_i32_0 = arith.constant 0 : i32
    %c0_i32_1 = arith.constant 0 : i32
    return %c0_i32, %c0_i32_0 : i32, i32
  }
  func.func @transform_5(%arg0: i32) -> (i32, i32) {
    %c0_i32 = arith.constant 0 : i32
    %c0_i32_0 = arith.constant 0 : i32
    %c0_i32_1 = arith.constant 0 : i32
    return %c0_i32, %c0_i32_0 : i32, i32
  }
  func.func @transform_6(%arg0: i32) -> (i32, i32) {
    %c0_i32 = arith.constant 0 : i32
    %c0_i32_0 = arith.constant 0 : i32
    %c0_i32_1 = arith.constant 0 : i32
    return %c0_i32, %c0_i32_0 : i32, i32
  }
  func.func @transform_7(%arg0: i32) -> (i32, i32) {
    %c0_i32 = arith.constant 0 : i32
    %c0_i32_0 = arith.constant 0 : i32
    %c0_i32_1 = arith.constant 0 : i32
    return %c0_i32, %c0_i32_0 : i32, i32
  }
  func.func @transform_8(%arg0: i32) -> (i32, i32) {
    %c0_i32 = arith.constant 0 : i32
    %c0_i32_0 = arith.constant 0 : i32
    %c0_i32_1 = arith.constant 0 : i32
    return %c0_i32, %c0_i32_0 : i32, i32
  }
  func.func @transform_9(%arg0: i32) -> (i32, i32) {
    %c0_i32 = arith.constant 0 : i32
    %c0_i32_0 = arith.constant 0 : i32
    %c0_i32_1 = arith.constant 0 : i32
    return %c0_i32, %c0_i32_0 : i32, i32
  }
  func.func @transform_10(%arg0: i32) -> (i32, i32, i32) {
    %c0_i32 = arith.constant 0 : i32
    %c0_i32_0 = arith.constant 0 : i32
    %c0_i32_1 = arith.constant 0 : i32
    return %arg0, %c0_i32, %c0_i32_0 : i32, i32, i32
  }
}

</mosaic_0001>

<llo_original>
// kernel: stem_forward.1
$region0: #{stem_forward.1}
  #allocation0 [shape = 'u32[]', space=smem, size = 0x4, offset = 0x4, fixed_abs, tag = 'smem constant byte address 0x4 - core index']
  #allocation1 [shape = 'u32[144,128]{1,0:T(1,128)}', space=vmem, size = 0x12000, scoped, tag = 'internal scratch']
  %s0 = inlined_call_operand.vmem [shape: f32[2,16,256], index: 0, kind: input, shape index: {}]
  %s1 = inlined_call_operand.vmem [shape: f32[12,256], index: 1, kind: input, shape index: {}]
  %s2 = inlined_call_operand.vmem [shape: f32[32,64], index: 2, kind: input, shape index: {}]
  %s3 = inlined_call_operand.vmem [shape: f32[32,1], index: 3, kind: input, shape index: {}]
  %s4 = inlined_call_operand.vmem [shape: f32[16,16], index: 4, kind: input, shape index: {}]
  %s5 = inlined_call_operand.vmem [shape: f32[16,1], index: 5, kind: input, shape index: {}]
  %s6 = inlined_call_operand.vmem [shape: f32[16,9], index: 6, kind: input, shape index: {}]
  %s7 = inlined_call_operand.vmem [shape: f32[16,1], index: 7, kind: input, shape index: {}]
  %s8 = inlined_call_operand.vmem [shape: f32[32,32], index: 8, kind: input, shape index: {}]
  %s9 = inlined_call_operand.vmem [shape: f32[32,1], index: 9, kind: input, shape index: {}]
  %s10 = inlined_call_operand.vmem [shape: f32[2,32,256], index: 10, kind: output, shape index: {}]
  %s11 = sld [smem:[#allocation0]]
  $region73: #{stem_forward.1} parent=0
    _
  %s13 = ssub.s32 1, %s11
  %s14 = scalar_select 0, %s13, %s11
  loop: start=0, step=1, limit=4
  $region2: #{stem_forward.1} parent=0 // loop_pre_header
    _
  $region3: #{stem_forward.1} parent=0 // loop_header
    %s16 = sphi 0, %s20
    %p17 = scmp.ge.s32.totalorder %s16, 4
    %s26 = sphi 0, %s28
    %s29 = sphi 0, %s26
    %s30 = sphi 0, %s29
    %s46 = sphi 0, %s30
    %s50 = sphi 0, %s50
    %s52 = sphi 0, %s50
    %s53 = sphi 0, %s52
    %s67 = sphi 0, %s53
    %s71 = sphi 0, %s71
    %s73 = sphi 0, %s71
    %s74 = sphi 0, %s73
    %s88 = sphi 0, %s74
    %s92 = sphi 0, %s92
    %s94 = sphi 0, %s92
    %s95 = sphi 0, %s94
    %s109 = sphi 0, %s95
    %s113 = sphi 0, %s113
    %s115 = sphi 0, %s113
    %s116 = sphi 0, %s115
    %s130 = sphi 0, %s116
    %s134 = sphi 0, %s134
    %s136 = sphi 0, %s134
    %s137 = sphi 0, %s136
    %s151 = sphi 0, %s137
    %s155 = sphi 0, %s155
    %s157 = sphi 0, %s155
    %s158 = sphi 0, %s157
    %s172 = sphi 0, %s158
    %s176 = sphi 0, %s176
    %s178 = sphi 0, %s176
    %s179 = sphi 0, %s178
    %s193 = sphi 0, %s179
    %s197 = sphi 0, %s197
    %s199 = sphi 0, %s197
    %s200 = sphi 0, %s199
    %s214 = sphi 0, %s200
    %s218 = sphi 0, %s218
    %s220 = sphi 0, %s218
    %s221 = sphi 0, %s220
    %s235 = sphi 0, %s221
    %s241 = sphi 0, %s243
    %s244 = sphi 0, %s241
    %s245 = sphi 0, %s244
    %s261 = sphi 0, %s245
  $region4: #{stem_forward.1} parent=0 // loop_header_branch
    %19 = sbr.rel (%p17) target = $region8
  $region5: #{stem_forward.1} parent=0 // loop_body
    %s21 = ssub.s32 %s16, 1
    %s22 = ssub.s32 %s16, 2
    %s23 = sadd.s32 %s16, 1
    %s24 = ssub.s32 %s16, %s23
    %p25 = scmp.eq.s32.totalorder %s24, 0
    %s27 = sadd.s32 %s26, 1
    %s28 = scalar_select %p25, %s26, %s27
    %p31 = pneg %p25
    %p32 = scmp.eq.s32.totalorder %s16, 1
    %p33 = por %p31, %p32
    %p34 = scmp.ne.s32.totalorder %s26, %s29
    %p35 = scmp.eq.s32.totalorder %s16, 0
    %p36 = por %p34, %p35
    %p37 = scmp.ne.s32.totalorder %s26, %s29
    %p38 = scmp.eq.s32.totalorder %s21, 1
    %p39 = por %p37, %p38
    %p40 = scmp.ne.s32.totalorder %s29, %s30
    %p41 = scmp.eq.s32.totalorder %s21, 0
    %p42 = por %p40, %p41
    %p43 = scmp.ne.s32.totalorder %s29, %s30
    %p44 = scmp.eq.s32.totalorder %s22, 1
    %p45 = por %p43, %p44
    %p47 = scmp.ne.s32.totalorder %s30, %s46
    %p48 = scmp.eq.s32.totalorder %s22, 0
    %p49 = por %p47, %p48
    %s51 = sadd.s32 %s50, 1
    %p54 = scmp.eq.s32.totalorder %s16, 1
    %p55 = scmp.ne.s32.totalorder %s50, %s52
    %p56 = scmp.eq.s32.totalorder %s16, 0
    %p57 = por %p55, %p56
    %p58 = scmp.ne.s32.totalorder %s50, %s52
    %p59 = scmp.eq.s32.totalorder %s21, 1
    %p60 = por %p58, %p59
    %p61 = scmp.ne.s32.totalorder %s52, %s53
    %p62 = scmp.eq.s32.totalorder %s21, 0
    %p63 = por %p61, %p62
    %p64 = scmp.ne.s32.totalorder %s52, %s53
    %p65 = scmp.eq.s32.totalorder %s22, 1
    %p66 = por %p64, %p65
    %p68 = scmp.ne.s32.totalorder %s53, %s67
    %p69 = scmp.eq.s32.totalorder %s22, 0
    %p70 = por %p68, %p69
    %s72 = sadd.s32 %s71, 1
    %p75 = scmp.eq.s32.totalorder %s16, 1
    %p76 = scmp.ne.s32.totalorder %s71, %s73
    %p77 = scmp.eq.s32.totalorder %s16, 0
    %p78 = por %p76, %p77
    %p79 = scmp.ne.s32.totalorder %s71, %s73
    %p80 = scmp.eq.s32.totalorder %s21, 1
    %p81 = por %p79, %p80
    %p82 = scmp.ne.s32.totalorder %s73, %s74
    %p83 = scmp.eq.s32.totalorder %s21, 0
    %p84 = por %p82, %p83
    %p85 = scmp.ne.s32.totalorder %s73, %s74
    %p86 = scmp.eq.s32.totalorder %s22, 1
    %p87 = por %p85, %p86
    %p89 = scmp.ne.s32.totalorder %s74, %s88
    %p90 = scmp.eq.s32.totalorder %s22, 0
    %p91 = por %p89, %p90
    %s93 = sadd.s32 %s92, 1
    %p96 = scmp.eq.s32.totalorder %s16, 1
    %p97 = scmp.ne.s32.totalorder %s92, %s94
    %p98 = scmp.eq.s32.totalorder %s16, 0
    %p99 = por %p97, %p98
    %p100 = scmp.ne.s32.totalorder %s92, %s94
    %p101 = scmp.eq.s32.totalorder %s21, 1
    %p102 = por %p100, %p101
    %p103 = scmp.ne.s32.totalorder %s94, %s95
    %p104 = scmp.eq.s32.totalorder %s21, 0
    %p105 = por %p103, %p104
    %p106 = scmp.ne.s32.totalorder %s94, %s95
    %p107 = scmp.eq.s32.totalorder %s22, 1
    %p108 = por %p106, %p107
    %p110 = scmp.ne.s32.totalorder %s95, %s109
    %p111 = scmp.eq.s32.totalorder %s22, 0
    %p112 = por %p110, %p111
    %s114 = sadd.s32 %s113, 1
    %p117 = scmp.eq.s32.totalorder %s16, 1
    %p118 = scmp.ne.s32.totalorder %s113, %s115
    %p119 = scmp.eq.s32.totalorder %s16, 0
    %p120 = por %p118, %p119
    %p121 = scmp.ne.s32.totalorder %s113, %s115
    %p122 = scmp.eq.s32.totalorder %s21, 1
    %p123 = por %p121, %p122
    %p124 = scmp.ne.s32.totalorder %s115, %s116
    %p125 = scmp.eq.s32.totalorder %s21, 0
    %p126 = por %p124, %p125
    %p127 = scmp.ne.s32.totalorder %s115, %s116
    %p128 = scmp.eq.s32.totalorder %s22, 1
    %p129 = por %p127, %p128
    %p131 = scmp.ne.s32.totalorder %s116, %s130
    %p132 = scmp.eq.s32.totalorder %s22, 0
    %p133 = por %p131, %p132
    %s135 = sadd.s32 %s134, 1
    %p138 = scmp.eq.s32.totalorder %s16, 1
    %p139 = scmp.ne.s32.totalorder %s134, %s136
    %p140 = scmp.eq.s32.totalorder %s16, 0
    %p141 = por %p139, %p140
    %p142 = scmp.ne.s32.totalorder %s134, %s136
    %p143 = scmp.eq.s32.totalorder %s21, 1
    %p144 = por %p142, %p143
    %p145 = scmp.ne.s32.totalorder %s136, %s137
    %p146 = scmp.eq.s32.totalorder %s21, 0
    %p147 = por %p145, %p146
    %p148 = scmp.ne.s32.totalorder %s136, %s137
    %p149 = scmp.eq.s32.totalorder %s22, 1
    %p150 = por %p148, %p149
    %p152 = scmp.ne.s32.totalorder %s137, %s151
    %p153 = scmp.eq.s32.totalorder %s22, 0
    %p154 = por %p152, %p153
    %s156 = sadd.s32 %s155, 1
    %p159 = scmp.eq.s32.totalorder %s16, 1
    %p160 = scmp.ne.s32.totalorder %s155, %s157
    %p161 = scmp.eq.s32.totalorder %s16, 0
    %p162 = por %p160, %p161
    %p163 = scmp.ne.s32.totalorder %s155, %s157
    %p164 = scmp.eq.s32.totalorder %s21, 1
    %p165 = por %p163, %p164
    %p166 = scmp.ne.s32.totalorder %s157, %s158
    %p167 = scmp.eq.s32.totalorder %s21, 0
    %p168 = por %p166, %p167
    %p169 = scmp.ne.s32.totalorder %s157, %s158
    %p170 = scmp.eq.s32.totalorder %s22, 1
    %p171 = por %p169, %p170
    %p173 = scmp.ne.s32.totalorder %s158, %s172
    %p174 = scmp.eq.s32.totalorder %s22, 0
    %p175 = por %p173, %p174
    %s177 = sadd.s32 %s176, 1
    %p180 = scmp.eq.s32.totalorder %s16, 1
    %p181 = scmp.ne.s32.totalorder %s176, %s178
    %p182 = scmp.eq.s32.totalorder %s16, 0
    %p183 = por %p181, %p182
    %p184 = scmp.ne.s32.totalorder %s176, %s178
    %p185 = scmp.eq.s32.totalorder %s21, 1
    %p186 = por %p184, %p185
    %p187 = scmp.ne.s32.totalorder %s178, %s179
    %p188 = scmp.eq.s32.totalorder %s21, 0
    %p189 = por %p187, %p188
    %p190 = scmp.ne.s32.totalorder %s178, %s179
    %p191 = scmp.eq.s32.totalorder %s22, 1
    %p192 = por %p190, %p191
    %p194 = scmp.ne.s32.totalorder %s179, %s193
    %p195 = scmp.eq.s32.totalorder %s22, 0
    %p196 = por %p194, %p195
    %s198 = sadd.s32 %s197, 1
    %p201 = scmp.eq.s32.totalorder %s16, 1
    %p202 = scmp.ne.s32.totalorder %s197, %s199
    %p203 = scmp.eq.s32.totalorder %s16, 0
    %p204 = por %p202, %p203
    %p205 = scmp.ne.s32.totalorder %s197, %s199
    %p206 = scmp.eq.s32.totalorder %s21, 1
    %p207 = por %p205, %p206
    %p208 = scmp.ne.s32.totalorder %s199, %s200
    %p209 = scmp.eq.s32.totalorder %s21, 0
    %p210 = por %p208, %p209
    %p211 = scmp.ne.s32.totalorder %s199, %s200
    %p212 = scmp.eq.s32.totalorder %s22, 1
    %p213 = por %p211, %p212
    %p215 = scmp.ne.s32.totalorder %s200, %s214
    %p216 = scmp.eq.s32.totalorder %s22, 0
    %p217 = por %p215, %p216
    %s219 = sadd.s32 %s218, 1
    %p222 = scmp.eq.s32.totalorder %s16, 1
    %p223 = scmp.ne.s32.totalorder %s218, %s220
    %p224 = scmp.eq.s32.totalorder %s16, 0
    %p225 = por %p223, %p224
    %p226 = scmp.ne.s32.totalorder %s218, %s220
    %p227 = scmp.eq.s32.totalorder %s21, 1
    %p228 = por %p226, %p227
    %p229 = scmp.ne.s32.totalorder %s220, %s221
    %p230 = scmp.eq.s32.totalorder %s21, 0
    %p231 = por %p229, %p230
    %p232 = scmp.ne.s32.totalorder %s220, %s221
    %p233 = scmp.eq.s32.totalorder %s22, 1
    %p234 = por %p232, %p233
    %p236 = scmp.ne.s32.totalorder %s221, %s235
    %p237 = scmp.eq.s32.totalorder %s22, 0
    %p238 = por %p236, %p237
    %s239 = ssub.s32 %s16, %s23
    %p240 = scmp.eq.s32.totalorder %s239, 0
    %s242 = sadd.s32 %s241, 1
    %s243 = scalar_select %p240, %s241, %s242
    %p246 = pneg %p240
    %p247 = scmp.eq.s32.totalorder %s16, 1
    %p248 = por %p246, %p247
    %p249 = scmp.ne.s32.totalorder %s241, %s244
    %p250 = scmp.eq.s32.totalorder %s16, 0
    %p251 = por %p249, %p250
    %p252 = scmp.ne.s32.totalorder %s241, %s244
    %p253 = scmp.eq.s32.totalorder %s21, 1
    %p254 = por %p252, %p253
    %p255 = scmp.ne.s32.totalorder %s244, %s245
    %p256 = scmp.eq.s32.totalorder %s21, 0
    %p257 = por %p255, %p256
    %p258 = scmp.ne.s32.totalorder %s244, %s245
    %p259 = scmp.eq.s32.totalorder %s22, 1
    %p260 = por %p258, %p259
    %p262 = scmp.ne.s32.totalorder %s245, %s261
    %p263 = scmp.eq.s32.totalorder %s22, 0
    %p264 = por %p262, %p263
    %p265 = scmp.le.s32.totalorder 1, %s16
    %p266 = scmp.lt.s32.totalorder %s16, 3
    %p267 = pnand %p265, %p266
    %p268 = pneg %p267
    // Predicated region
    $region9: #{stem_forward.1} parent=5 // pred_check
      _
    $region10: #{stem_forward.1} parent=5 // pred_check_branch
      %270 = sbr.rel (%p267) target = $region12
    $region11: #{stem_forward.1} parent=5 // pred_region
      %s271 = ssub.s32 %s16, 1
      // Predicated region
      $region13: #{stem_forward.1} parent=11 // pred_check
        %p272 = pneg %p63
      $region14: #{stem_forward.1} parent=11 // pred_check_branch
        %274 = sbr.rel (%p272) target = $region16
      $region15: #{stem_forward.1} parent=11 // pred_region
        _
      $region16: #{stem_forward.1} parent=11 // pred_fallthru
        _
      // Predicated region
      $region17: #{stem_forward.1} parent=11 // pred_check
        %p275 = pneg %p84
      $region18: #{stem_forward.1} parent=11 // pred_check_branch
        %277 = sbr.rel (%p275) target = $region20
      $region19: #{stem_forward.1} parent=11 // pred_region
        _
      $region20: #{stem_forward.1} parent=11 // pred_fallthru
        _
      // Predicated region
      $region21: #{stem_forward.1} parent=11 // pred_check
        %p278 = pneg %p105
      $region22: #{stem_forward.1} parent=11 // pred_check_branch
        %280 = sbr.rel (%p278) target = $region24
      $region23: #{stem_forward.1} parent=11 // pred_region
        _
      $region24: #{stem_forward.1} parent=11 // pred_fallthru
        _
      // Predicated region
      $region25: #{stem_forward.1} parent=11 // pred_check
        %p281 = pneg %p126
      $region26: #{stem_forward.1} parent=11 // pred_check_branch
        %283 = sbr.rel (%p281) target = $region28
      $region27: #{stem_forward.1} parent=11 // pred_region
        _
      $region28: #{stem_forward.1} parent=11 // pred_fallthru
        _
      // Predicated region
      $region29: #{stem_forward.1} parent=11 // pred_check
        %p284 = pneg %p147
      $region30: #{stem_forward.1} parent=11 // pred_check_branch
        %286 = sbr.rel (%p284) target = $region32
      $region31: #{stem_forward.1} parent=11 // pred_region
        _
      $region32: #{stem_forward.1} parent=11 // pred_fallthru
        _
      // Predicated region
      $region33: #{stem_forward.1} parent=11 // pred_check
        %p287 = pneg %p168
      $region34: #{stem_forward.1} parent=11 // pred_check_branch
        %289 = sbr.rel (%p287) target = $region36
      $region35: #{stem_forward.1} parent=11 // pred_region
        _
      $region36: #{stem_forward.1} parent=11 // pred_fallthru
        _
      // Predicated region
      $region37: #{stem_forward.1} parent=11 // pred_check
        %p290 = pneg %p189
      $region38: #{stem_forward.1} parent=11 // pred_check_branch
        %292 = sbr.rel (%p290) target = $region40
      $region39: #{stem_forward.1} parent=11 // pred_region
        _
      $region40: #{stem_forward.1} parent=11 // pred_fallthru
        _
      // Predicated region
      $region41: #{stem_forward.1} parent=11 // pred_check
        %p293 = pneg %p210
      $region42: #{stem_forward.1} parent=11 // pred_check_branch
        %295 = sbr.rel (%p293) target = $region44
      $region43: #{stem_forward.1} parent=11 // pred_region
        _
      $region44: #{stem_forward.1} parent=11 // pred_fallthru
        _
      // Predicated region
      $region45: #{stem_forward.1} parent=11 // pred_check
        %p296 = pneg %p231
      $region46: #{stem_forward.1} parent=11 // pred_check_branch
        %298 = sbr.rel (%p296) target = $region48
      $region47: #{stem_forward.1} parent=11 // pred_region
        _
      $region48: #{stem_forward.1} parent=11 // pred_fallthru
        _
    $region12: #{stem_forward.1} parent=5 // pred_fallthru
      _
    %p299 = scmp.lt.s32.totalorder %s16, 2
    // Predicated region
    $region49: #{stem_forward.1} parent=5 // pred_check
      %p300 = pneg %p299
    $region50: #{stem_forward.1} parent=5 // pred_check_branch
      %302 = sbr.rel (%p300) target = $region52
    $region51: #{stem_forward.1} parent=5 // pred_region
      // Predicated region
      $region53: #{stem_forward.1} parent=51 // pred_check
        %p303 = pneg %p36
      $region54: #{stem_forward.1} parent=51 // pred_check_branch
        %305 = sbr.rel (%p303) target = $region56
      $region55: #{stem_forward.1} parent=51 // pred_region
        %p306 = scmp.lt.s32.totalorder %s16, 1
        %s307 = scalar_select %p306, %s16, 1
        %s308 = smul.addr %s307, 4
        %s309 = smul.addr %s308, 8
        %s310 = scalar_lea.vmem %s0, %s309
      $region56: #{stem_forward.1} parent=51 // pred_fallthru
        _
    $region52: #{stem_forward.1} parent=5 // pred_fallthru
      _
    %p311 = scmp.le.s32.totalorder 1, %s16
    %p312 = scmp.lt.s32.totalorder %s16, 3
    %p313 = pnand %p311, %p312
    %p314 = pneg %p313
    // Predicated region
    $region57: #{stem_forward.1} parent=5 // pred_check
      _
    $region58: #{stem_forward.1} parent=5 // pred_check_branch
      %316 = sbr.rel (%p313) target = $region60
    $region59: #{stem_forward.1} parent=5 // pred_region
      %s317 = ssub.s32 %s16, 1
      %p318 = scmp.lt.s32.totalorder %s21, 1
      %s319 = scalar_select %p318, %s21, 1
      %s320 = smul.addr %s319, 4
      %s321 = smul.addr %s320, 8
      %s322 = scalar_lea.vmem %s0, %s321
      %p323 = pneg %p42
      %p324 = pneg %p39
      %p325 = pneg %p63
      %p326 = pneg %p60
      %p327 = pneg %p84
      %p328 = pneg %p81
      %p329 = pneg %p105
      %p330 = pneg %p102
      %p331 = pneg %p126
      %p332 = pneg %p123
      %p333 = pneg %p147
      %p334 = pneg %p144
      %p335 = pneg %p168
      %p336 = pneg %p165
      %p337 = pneg %p189
      %p338 = pneg %p186
      %p339 = pneg %p210
      %p340 = pneg %p207
      %p341 = pneg %p231
      %p342 = pneg %p228
      %p343 = pneg %p257
      %p344 = pneg %p254
      %p345 = scmp.lt.s32.totalorder %s21, 1
      %s346 = scalar_select %p345, %s21, 1
      %s347 = smul.addr %s346, 8
      %s348 = smul.addr %s347, 8
      %s349 = scalar_lea.vmem %s10, %s348
      %p350 = scmp.lt.s32.totalorder %s21, 1
      %s351 = scalar_select %p350, %s21, 1
      %s352 = smul.addr %s351, 4
      %s353 = smul.addr %s352, 8
      %s354 = scalar_lea.vmem %s0, %s353
      %p355 = scmp.lt.s32.totalorder %s21, 1
      %s356 = scalar_select %p355, %s21, 1
      %s357 = smul.addr %s356, 8
      %s358 = smul.addr %s357, 8
      %s359 = scalar_lea.vmem %s10, %s358
      %v360 = vld [vmem:[%s354] sm:$0xff]
      %v361 = vld [vmem:[%s354 + $0x8] sm:$0xff]
      %v362 = vld [vmem:[%s354 + $0x10] sm:$0xff]
      %v363 = vld [vmem:[%s354 + $0x18] sm:$0xff]
      %v364 = vld [vmem:[%s1] sm:$0xff]
      %v365 = vld [vmem:[%s1 + $0x8] sm:$0xff]
      %v366 = vld [vmem:[%s1 + $0x10] sm:$0xf]
      %v367 = vld [vmem:[%s1 + $0x18] sm:$0xf]
      %368 = vrot.lane.b32.xlu0 %v360, 1
      %v369 = vpop.permute.xlu0 %368
      %370 = vrot.lane.b32.xlu0 %v362, 1
      %v371 = vpop.permute.xlu0 %370
      %372 = vrot.lane.b32.xlu0 %v361, 1
      %v373 = vpop.permute.xlu0 %372
      %374 = vrot.lane.b32.xlu0 %v363, 1
      %v375 = vpop.permute.xlu0 %374
      %v376 = vlaneseq
      %v377 = vand.u32 %v376, 127
      %vm378 = vcmp.lt.s32.totalorder %v377, 1
      %v379 = vsel %vm378, %v369, %v373
      %v380 = vsel %vm378, %v371, %v375
      %v381 = vsel %vm378, %v373, %v369
      %v382 = vsel %vm378, %v375, %v371
      %v383 = vlaneseq
      %v384 = vshrl.u32 %v383, 7
      %v385 = vsub.s32 0, %v384
      %v386 = vrot.slane %v364, %v385
      %v387 = vlaneseq
      %v388 = vshrl.u32 %v387, 7
      %v389 = vsub.s32 0, %v388
      %v390 = vrot.slane %v365, %v389
      %v391 = vmul.f32 %v381, %v386
      %v392 = vmul.f32 %v379, %v390
      %v393 = vmul.f32 %v382, %v386
      %v394 = vmul.f32 %v380, %v390
      %395 = vrot.lane.b32.xlu0 %v360, 16
      %v396 = vpop.permute.xlu0 %395
      %397 = vrot.lane.b32.xlu0 %v362, 16
      %v398 = vpop.permute.xlu0 %397
      %399 = vrot.lane.b32.xlu0 %v361, 16
      %v400 = vpop.permute.xlu0 %399
      %401 = vrot.lane.b32.xlu0 %v363, 16
      %v402 = vpop.permute.xlu0 %401
      %vm403 = vcmp.lt.s32.totalorder %v377, 16
      %v404 = vsel %vm403, %v396, %v400
      %v405 = vsel %vm403, %v398, %v402
      %v406 = vsel %vm403, %v400, %v396
      %v407 = vsel %vm403, %v402, %v398
      %v408 = vlaneseq
      %v409 = vshrl.u32 %v408, 7
      %v410 = vsub.s32 1, %v409
      %v411 = vrot.slane %v364, %v410
      %v412 = vlaneseq
      %v413 = vshrl.u32 %v412, 7
      %v414 = vsub.s32 1, %v413
      %v415 = vrot.slane %v365, %v414
      %v416 = vmul.f32 %v406, %v411
      %v417 = vmul.f32 %v404, %v415
      %v418 = vmul.f32 %v407, %v411
      %v419 = vmul.f32 %v405, %v415
      %420 = vrot.lane.b32.xlu0 %v360, 17
      %v421 = vpop.permute.xlu0 %420
      %422 = vrot.lane.b32.xlu0 %v362, 17
      %v423 = vpop.permute.xlu0 %422
      %424 = vrot.lane.b32.xlu0 %v361, 17
      %v425 = vpop.permute.xlu0 %424
      %426 = vrot.lane.b32.xlu0 %v363, 17
      %v427 = vpop.permute.xlu0 %426
      %vm428 = vcmp.lt.s32.totalorder %v377, 17
      %v429 = vsel %vm428, %v421, %v425
      %v430 = vsel %vm428, %v423, %v427
      %v431 = vsel %vm428, %v425, %v421
      %v432 = vsel %vm428, %v427, %v423
      %v433 = vlaneseq
      %v434 = vshrl.u32 %v433, 7
      %v435 = vsub.s32 2, %v434
      %v436 = vrot.slane %v364, %v435
      %v437 = vlaneseq
      %v438 = vshrl.u32 %v437, 7
      %v439 = vsub.s32 2, %v438
      %v440 = vrot.slane %v365, %v439
      %v441 = vmul.f32 %v431, %v436
      %v442 = vmul.f32 %v429, %v440
      %v443 = vmul.f32 %v432, %v436
      %v444 = vmul.f32 %v430, %v440
      %v445 = vld [vmem:[%s2] sm:$0xff]
      %v446 = vld [vmem:[%s2 + $0x8] sm:$0xff]
      %v447 = vld [vmem:[%s2 + $0x10] sm:$0xff]
      %v448 = vld [vmem:[%s2 + $0x18] sm:$0xff]
      %v449 = vld [vmem:[%s3] sm:$0xff]
      %v450 = vld [vmem:[%s3 + $0x8] sm:$0xff]
      %v451 = vld [vmem:[%s3 + $0x10] sm:$0xff]
      %v452 = vld [vmem:[%s3 + $0x18] sm:$0xff]
      %454 = vset.pattern.permute.xlu0 0
      %455 = vperm.xlu0 %454, %v449
      %v456 = vpop.permute.xlu0 %455
      %459 = vset.pattern.permute.xlu0 0
      %460 = vperm.xlu0 %459, %v450
      %v461 = vpop.permute.xlu0 %460
      %464 = vset.pattern.permute.xlu0 0
      %465 = vperm.xlu0 %464, %v451
      %v466 = vpop.permute.xlu0 %465
      %469 = vset.pattern.permute.xlu0 0
      %470 = vperm.xlu0 %469, %v452
      %v471 = vpop.permute.xlu0 %470
      %vm473 = vcmask 523264
      %v475 = vsel %vm473, %v445, 0
      %v478 = vsel %vm473, %v446, 0
      %v481 = vsel %vm473, %v447, 0
      %v484 = vsel %vm473, %v448, 0
      %486 = vmatprep.subr.mxu0 %v361
      %487 = vmatpush1.msra.mxu0 %v360
      %488 = vmatprep.subr.mxu0 %v363
      %489 = vmatpush1.msra.mxu0 %v362
      %490 = vmatprep.subr.mxu0 %v392
      %491 = vmatpush1.msra.mxu0 %v391
      %492 = vmatprep.subr.mxu0 %v394
      %493 = vmatpush1.msra.mxu0 %v393
      %494 = vmatprep.subr.mxu0 %v417
      %495 = vmatpush1.msra.mxu0 %v416
      %496 = vmatprep.subr.mxu0 %v419
      %497 = vmatpush1.msra.mxu0 %v418
      %498 = vmatprep.subr.mxu0 %v442
      %499 = vmatpush1.msra.mxu0 %v441
      %500 = vmatprep.subr.mxu0 %v444
      %501 = vmatpush1.msra.mxu0 %v443
      %502 = vmatprep.subr.mxu0 0.0
      %503 = vmatpush1.msra.mxu0 0.0
      %504 = vmatprep.subr.mxu0 0.0
      %505 = vmatpush1.msra.mxu0 0.0
      %506 = vmatprep.subr.mxu0 0.0
      %507 = vmatpush1.msra.mxu0 0.0
      %508 = vmatprep.subr.mxu0 0.0
      %509 = vmatpush1.msra.mxu0 0.0
      %510 = vmatprep.subr.mxu0 0.0
      %511 = vmatpush1.msra.mxu0 0.0
      %512 = vmatprep.subr.mxu0 0.0
      %513 = vmatpush1.msra.mxu0 0.0
      %514 = vmatprep.subr.mxu0 0.0
      %515 = vmatpush1.msra.mxu0 0.0
      %516 = vmatprep.subr.mxu0 0.0
      %517 = vmatpush1.msra.mxu0 0.0
      %518 = vmatprep.subr.mxu0 0.0
      %519 = vmatpush1.msra.mxu0 0.0
      %520 = vmatprep.subr.mxu0 0.0
      %521 = vmatpush1.msra.mxu0 0.0
      %522 = vmatprep.subr.mxu0 0.0
      %523 = vmatpush1.msra.mxu0 0.0
      %524 = vmatprep.subr.mxu0 0.0
      %525 = vmatpush1.msra.mxu0 0.0
      %526 = vmatprep.subr.mxu0 0.0
      %527 = vmatpush1.msra.mxu0 0.0
      %528 = vmatprep.subr.mxu0 0.0
      %529 = vmatpush1.msra.mxu0 0.0
      %530 = vmatprep.subr.mxu0 0.0
      %531 = vmatpush1.msra.mxu0 0.0
      %532 = vmatprep.subr.mxu0 0.0
      %533 = vmatpush1.msra.mxu0 0.0
      %534 = vmatprep.subr.mxu0 0.0
      %535 = vmatpush1.msra.mxu0 0.0
      %536 = vmatprep.subr.mxu0 0.0
      %537 = vmatpush1.msra.mxu0 0.0
      %538 = vmatprep.subr.mxu0 0.0
      %539 = vmatpush1.msra.mxu0 0.0
      %540 = vmatprep.subr.mxu0 0.0
      %541 = vmatpush1.msra.mxu0 0.0
      %542 = vmatprep.subr.mxu0 0.0
      %543 = vmatpush1.msra.mxu0 0.0
      %544 = vmatprep.subr.mxu0 0.0
      %545 = vmatpush1.msra.mxu0 0.0
      %546 = vmatprep.subr.mxu0 0.0
      %547 = vmatpush1.msra.mxu0 0.0
      %548 = vmatprep.subr.mxu0 0.0
      %549 = vmatpush1.msra.mxu0 0.0
      %550 = vmatprep.mubr.f32.mxu0 0.0
      %551 = vmatmul.mubr.f32.gmra.mrb[0].mxu0 %v475
      %v552 = vpop.f32.mrb[0].mxu0
      %v553 = vadd.f32 %v456, %v552
      %v554 = vpop.f32.mrb[0].mxu0
      %v555 = vadd.f32 %v456, %v554
      %556 = vmatprep.mubr.f32.mxu0 0.0
      %557 = vmatmul.mubr.f32.gmra.mrb[0].mxu0 %v478
      %v558 = vpop.f32.mrb[0].mxu0
      %v559 = vadd.f32 %v461, %v558
      %v560 = vpop.f32.mrb[0].mxu0
      %v561 = vadd.f32 %v461, %v560
      %562 = vmatprep.mubr.f32.mxu0 0.0
      %563 = vmatmul.mubr.f32.gmra.mrb[0].mxu0 %v481
      %v564 = vpop.f32.mrb[0].mxu0
      %v565 = vadd.f32 %v466, %v564
      %v566 = vpop.f32.mrb[0].mxu0
      %v567 = vadd.f32 %v466, %v566
      %568 = vmatprep.mubr.f32.mxu0 0.0
      %569 = vmatmul.mubr.f32.gmra.mrb[0].mxu0 %v484
      %v570 = vpop.f32.mrb[0].mxu0
      %v571 = vadd.f32 %v471, %v570
      %v572 = vpop.f32.mrb[0].mxu0
      %v573 = vadd.f32 %v471, %v572
      %574 = vdwg.mxu0
      %v575 = vmax.f32 %v553, 0.0
      %v576 = vmax.f32 %v555, 0.0
      %v577 = vmax.f32 %v559, 0.0
      %v578 = vmax.f32 %v561, 0.0
      %v579 = vmax.f32 %v565, 0.0
      %v580 = vmax.f32 %v567, 0.0
      %v581 = vmax.f32 %v571, 0.0
      %v582 = vmax.f32 %v573, 0.0
      %v583 = vld [vmem:[%s4] sm:$0xff]
      %v584 = vld [vmem:[%s4 + $0x8] sm:$0xff]
      %v585 = vld [vmem:[%s5] sm:$0xff]
      %v586 = vld [vmem:[%s5 + $0x8] sm:$0xff]
      %588 = vset.pattern.permute.xlu0 0
      %589 = vperm.xlu0 %588, %v585
      %v590 = vpop.permute.xlu0 %589
      %593 = vset.pattern.permute.xlu0 0
      %594 = vperm.xlu0 %593, %v586
      %v595 = vpop.permute.xlu0 %594
      %vm597 = vcmask 130048
      %v599 = vsel %vm597, %v583, 0
      %v602 = vsel %vm597, %v584, 0
      %604 = vmatprep.subr.mxu0 %v580
      %605 = vmatpush1.msra.mxu0 %v579
      %606 = vmatprep.subr.mxu0 %v582
      %607 = vmatpush1.msra.mxu0 %v581
      %608 = vmatprep.subr.mxu0 0.0
      %609 = vmatpush1.msra.mxu0 0.0
      %610 = vmatprep.subr.mxu0 0.0
      %611 = vmatpush1.msra.mxu0 0.0
      %612 = vmatprep.subr.mxu0 0.0
      %613 = vmatpush1.msra.mxu0 0.0
      %614 = vmatprep.subr.mxu0 0.0
      %615 = vmatpush1.msra.mxu0 0.0
      %616 = vmatprep.subr.mxu0 0.0
      %617 = vmatpush1.msra.mxu0 0.0
      %618 = vmatprep.subr.mxu0 0.0
      %619 = vmatpush1.msra.mxu0 0.0
      %620 = vmatprep.subr.mxu0 0.0
      %621 = vmatpush1.msra.mxu0 0.0
      %622 = vmatprep.subr.mxu0 0.0
      %623 = vmatpush1.msra.mxu0 0.0
      %624 = vmatprep.subr.mxu0 0.0
      %625 = vmatpush1.msra.mxu0 0.0
      %626 = vmatprep.subr.mxu0 0.0
      %627 = vmatpush1.msra.mxu0 0.0
      %628 = vmatprep.subr.mxu0 0.0
      %629 = vmatpush1.msra.mxu0 0.0
      %630 = vmatprep.subr.mxu0 0.0
      %631 = vmatpush1.msra.mxu0 0.0
      %632 = vmatprep.subr.mxu0 0.0
      %633 = vmatpush1.msra.mxu0 0.0
      %634 = vmatprep.subr.mxu0 0.0
      %635 = vmatpush1.msra.mxu0 0.0
      %636 = vmatprep.subr.mxu0 0.0
      %637 = vmatpush1.msra.mxu0 0.0
      %638 = vmatprep.subr.mxu0 0.0
      %639 = vmatpush1.msra.mxu0 0.0
      %640 = vmatprep.subr.mxu0 0.0
      %641 = vmatpush1.msra.mxu0 0.0
      %642 = vmatprep.subr.mxu0 0.0
      %643 = vmatpush1.msra.mxu0 0.0
      %644 = vmatprep.subr.mxu0 0.0
      %645 = vmatpush1.msra.mxu0 0.0
      %646 = vmatprep.subr.mxu0 0.0
      %647 = vmatpush1.msra.mxu0 0.0
      %648 = vmatprep.subr.mxu0 0.0
      %649 = vmatpush1.msra.mxu0 0.0
      %650 = vmatprep.subr.mxu0 0.0
      %651 = vmatpush1.msra.mxu0 0.0
      %652 = vmatprep.subr.mxu0 0.0
      %653 = vmatpush1.msra.mxu0 0.0
      %654 = vmatprep.subr.mxu0 0.0
      %655 = vmatpush1.msra.mxu0 0.0
      %656 = vmatprep.subr.mxu0 0.0
      %657 = vmatpush1.msra.mxu0 0.0
      %658 = vmatprep.subr.mxu0 0.0
      %659 = vmatpush1.msra.mxu0 0.0
      %660 = vmatprep.subr.mxu0 0.0
      %661 = vmatpush1.msra.mxu0 0.0
      %662 = vmatprep.subr.mxu0 0.0
      %663 = vmatpush1.msra.mxu0 0.0
      %664 = vmatprep.subr.mxu0 0.0
      %665 = vmatpush1.msra.mxu0 0.0
      %666 = vmatprep.subr.mxu0 0.0
      %667 = vmatpush1.msra.mxu0 0.0
      %668 = vmatprep.mubr.f32.mxu0 0.0
      %669 = vmatmul.mubr.f32.gmra.mrb[0].mxu0 %v599
      %v670 = vpop.f32.mrb[0].mxu0
      %v671 = vadd.f32 %v590, %v670
      %v672 = vpop.f32.mrb[0].mxu0
      %v673 = vadd.f32 %v590, %v672
      %674 = vmatprep.mubr.f32.mxu0 0.0
      %675 = vmatmul.mubr.f32.gmra.mrb[0].mxu0 %v602
      %v676 = vpop.f32.mrb[0].mxu0
      %v677 = vadd.f32 %v595, %v676
      %v678 = vpop.f32.mrb[0].mxu0
      %v679 = vadd.f32 %v595, %v678
      %680 = vdwg.mxu0
      %v681 = vmax.f32 %v671, 0.0
      %v682 = vmax.f32 %v673, 0.0
      %v683 = vmax.f32 %v677, 0.0
      %v684 = vmax.f32 %v679, 0.0
      %v685 = vld [vmem:[%s6] sm:$0xff]
      %v686 = vld [vmem:[%s6 + $0x8] sm:$0xff]
      %688 = vset.pattern.permute.xlu0 4
      %689 = vperm.xlu0 %688, %v685
      %v690 = vpop.permute.xlu0 %689
      %693 = vset.pattern.permute.xlu0 4
      %694 = vperm.xlu0 %693, %v686
      %v695 = vpop.permute.xlu0 %694
      %v697 = vmul.f32 %v681, %v690
      %v698 = vmul.f32 %v682, %v690
      %v699 = vmul.f32 %v683, %v695
      %v700 = vmul.f32 %v684, %v695
      %701 = vrot.lane.b32.xlu0 %v681, 17
      %v702 = vpop.permute.xlu0 %701
      %703 = vrot.lane.b32.xlu0 %v683, 17
      %v704 = vpop.permute.xlu0 %703
      %705 = vrot.lane.b32.xlu0 %v682, 17
      %v706 = vpop.permute.xlu0 %705
      %707 = vrot.lane.b32.xlu0 %v684, 17
      %v708 = vpop.permute.xlu0 %707
      %v709 = vsel %vm428, %v702, %v706
      %v710 = vsel %vm428, %v704, %v708
      %v711 = vsel %vm428, %v706, %v702
      %v712 = vsel %vm428, %v708, %v704
      %v713 = vlaneseq
      %v714 = vshrl.u32 %v713, 7
      %v715 = vsub.s32 3, %v714
      %v716 = vrot.slane %v364, %v715
      %v717 = vlaneseq
      %v718 = vshrl.u32 %v717, 7
      %v719 = vsub.s32 3, %v718
      %v720 = vrot.slane %v365, %v719
      %v721 = vmul.f32 %v711, %v716
      %v722 = vmul.f32 %v709, %v720
      %v723 = vmul.f32 %v712, %v716
      %v724 = vmul.f32 %v710, %v720
      %725 = vset.pattern.permute.xlu0 0
      %726 = vperm.xlu0 %725, %v685
      %v727 = vpop.permute.xlu0 %726
      %729 = vset.pattern.permute.xlu0 0
      %730 = vperm.xlu0 %729, %v686
      %v731 = vpop.permute.xlu0 %730
      %v733 = vmul.f32 %v721, %v727
      %v734 = vmul.f32 %v722, %v727
      %v735 = vmul.f32 %v723, %v731
      %v736 = vmul.f32 %v724, %v731
      %v737 = vadd.f32 %v697, %v733
      %v738 = vadd.f32 %v698, %v734
      %v739 = vadd.f32 %v699, %v735
      %v740 = vadd.f32 %v700, %v736
      %741 = vrot.lane.b32.xlu0 %v681, 16
      %v742 = vpop.permute.xlu0 %741
      %743 = vrot.lane.b32.xlu0 %v683, 16
      %v744 = vpop.permute.xlu0 %743
      %745 = vrot.lane.b32.xlu0 %v682, 16
      %v746 = vpop.permute.xlu0 %745
      %747 = vrot.lane.b32.xlu0 %v684, 16
      %v748 = vpop.permute.xlu0 %747
      %v749 = vsel %vm403, %v742, %v746
      %v750 = vsel %vm403, %v744, %v748
      %v751 = vsel %vm403, %v746, %v742
      %v752 = vsel %vm403, %v748, %v744
      %v753 = vlaneseq
      %v754 = vshrl.u32 %v753, 7
      %v755 = vsub.s32 4, %v754
      %v756 = vrot.slane %v364, %v755
      %v757 = vlaneseq
      %v758 = vshrl.u32 %v757, 7
      %v759 = vsub.s32 4, %v758
      %v760 = vrot.slane %v365, %v759
      %v761 = vmul.f32 %v751, %v756
      %v762 = vmul.f32 %v749, %v760
      %v763 = vmul.f32 %v752, %v756
      %v764 = vmul.f32 %v750, %v760
      %765 = vset.pattern.permute.xlu0 1
      %766 = vperm.xlu0 %765, %v685
      %v767 = vpop.permute.xlu0 %766
      %769 = vset.pattern.permute.xlu0 1
      %770 = vperm.xlu0 %769, %v686
      %v771 = vpop.permute.xlu0 %770
      %v773 = vmul.f32 %v761, %v767
      %v774 = vmul.f32 %v762, %v767
      %v775 = vmul.f32 %v763, %v771
      %v776 = vmul.f32 %v764, %v771
      %v777 = vadd.f32 %v737, %v773
      %v778 = vadd.f32 %v738, %v774
      %v779 = vadd.f32 %v739, %v775
      %v780 = vadd.f32 %v740, %v776
      %781 = vrot.lane.b32.xlu0 %v681, 15
      %v782 = vpop.permute.xlu0 %781
      %783 = vrot.lane.b32.xlu0 %v683, 15
      %v784 = vpop.permute.xlu0 %783
      %785 = vrot.lane.b32.xlu0 %v682, 15
      %v786 = vpop.permute.xlu0 %785
      %787 = vrot.lane.b32.xlu0 %v684, 15
      %v788 = vpop.permute.xlu0 %787
      %vm789 = vcmp.lt.s32.totalorder %v377, 15
      %v790 = vsel %vm789, %v782, %v786
      %v791 = vsel %vm789, %v784, %v788
      %v792 = vsel %vm789, %v786, %v782
      %v793 = vsel %vm789, %v788, %v784
      %v794 = vlaneseq
      %v795 = vshrl.u32 %v794, 7
      %v796 = vsub.s32 5, %v795
      %v797 = vrot.slane %v364, %v796
      %v798 = vlaneseq
      %v799 = vshrl.u32 %v798, 7
      %v800 = vsub.s32 5, %v799
      %v801 = vrot.slane %v365, %v800
      %v802 = vmul.f32 %v792, %v797
      %v803 = vmul.f32 %v790, %v801
      %v804 = vmul.f32 %v793, %v797
      %v805 = vmul.f32 %v791, %v801
      %806 = vset.pattern.permute.xlu0 2
      %807 = vperm.xlu0 %806, %v685
      %v808 = vpop.permute.xlu0 %807
      %810 = vset.pattern.permute.xlu0 2
      %811 = vperm.xlu0 %810, %v686
      %v812 = vpop.permute.xlu0 %811
      %v814 = vmul.f32 %v802, %v808
      %v815 = vmul.f32 %v803, %v808
      %v816 = vmul.f32 %v804, %v812
      %v817 = vmul.f32 %v805, %v812
      %v818 = vadd.f32 %v777, %v814
      %v819 = vadd.f32 %v778, %v815
      %v820 = vadd.f32 %v779, %v816
      %v821 = vadd.f32 %v780, %v817
      %822 = vrot.lane.b32.xlu0 %v681, 1
      %v823 = vpop.permute.xlu0 %822
      %824 = vrot.lane.b32.xlu0 %v683, 1
      %v825 = vpop.permute.xlu0 %824
      %826 = vrot.lane.b32.xlu0 %v682, 1
      %v827 = vpop.permute.xlu0 %826
      %828 = vrot.lane.b32.xlu0 %v684, 1
      %v829 = vpop.permute.xlu0 %828
      %v830 = vsel %vm378, %v823, %v827
      %v831 = vsel %vm378, %v825, %v829
      %v832 = vsel %vm378, %v827, %v823
      %v833 = vsel %vm378, %v829, %v825
      %v834 = vlaneseq
      %v835 = vshrl.u32 %v834, 7
      %v836 = vsub.s32 6, %v835
      %v837 = vrot.slane %v364, %v836
      %v838 = vlaneseq
      %v839 = vshrl.u32 %v838, 7
      %v840 = vsub.s32 6, %v839
      %v841 = vrot.slane %v365, %v840
      %v842 = vmul.f32 %v832, %v837
      %v843 = vmul.f32 %v830, %v841
      %v844 = vmul.f32 %v833, %v837
      %v845 = vmul.f32 %v831, %v841
      %846 = vset.pattern.permute.xlu0 3
      %847 = vperm.xlu0 %846, %v685
      %v848 = vpop.permute.xlu0 %847
      %850 = vset.pattern.permute.xlu0 3
      %851 = vperm.xlu0 %850, %v686
      %v852 = vpop.permute.xlu0 %851
      %v854 = vmul.f32 %v842, %v848
      %v855 = vmul.f32 %v843, %v848
      %v856 = vmul.f32 %v844, %v852
      %v857 = vmul.f32 %v845, %v852
      %v858 = vadd.f32 %v818, %v854
      %v859 = vadd.f32 %v819, %v855
      %v860 = vadd.f32 %v820, %v856
      %v861 = vadd.f32 %v821, %v857
      %862 = vrot.lane.b32.xlu0 %v681, 127
      %v863 = vpop.permute.xlu0 %862
      %864 = vrot.lane.b32.xlu0 %v683, 127
      %v865 = vpop.permute.xlu0 %864
      %866 = vrot.lane.b32.xlu0 %v682, 127
      %v867 = vpop.permute.xlu0 %866
      %868 = vrot.lane.b32.xlu0 %v684, 127
      %v869 = vpop.permute.xlu0 %868
      %vm870 = vcmp.lt.s32.totalorder %v377, 127
      %v871 = vsel %vm870, %v863, %v867
      %v872 = vsel %vm870, %v865, %v869
      %v873 = vsel %vm870, %v867, %v863
      %v874 = vsel %vm870, %v869, %v865
      %v875 = vlaneseq
      %v876 = vshrl.u32 %v875, 7
      %v877 = vsub.s32 0, %v876
      %v878 = vrot.slane %v366, %v877
      %v879 = vlaneseq
      %v880 = vshrl.u32 %v879, 7
      %v881 = vsub.s32 0, %v880
      %v882 = vrot.slane %v367, %v881
      %v883 = vmul.f32 %v871, %v878
      %v884 = vmul.f32 %v873, %v882
      %v885 = vmul.f32 %v872, %v878
      %v886 = vmul.f32 %v874, %v882
      %887 = vset.pattern.permute.xlu0 5
      %888 = vperm.xlu0 %887, %v685
      %v889 = vpop.permute.xlu0 %888
      %891 = vset.pattern.permute.xlu0 5
      %892 = vperm.xlu0 %891, %v686
      %v893 = vpop.permute.xlu0 %892
      %v895 = vmul.f32 %v883, %v889
      %v896 = vmul.f32 %v884, %v889
      %v897 = vmul.f32 %v885, %v893
      %v898 = vmul.f32 %v886, %v893
      %v899 = vadd.f32 %v858, %v895
      %v900 = vadd.f32 %v859, %v896
      %v901 = vadd.f32 %v860, %v897
      %v902 = vadd.f32 %v861, %v898
      %903 = vrot.lane.b32.xlu0 %v681, 113
      %v904 = vpop.permute.xlu0 %903
      %905 = vrot.lane.b32.xlu0 %v683, 113
      %v906 = vpop.permute.xlu0 %905
      %907 = vrot.lane.b32.xlu0 %v682, 113
      %v908 = vpop.permute.xlu0 %907
      %909 = vrot.lane.b32.xlu0 %v684, 113
      %v910 = vpop.permute.xlu0 %909
      %vm911 = vcmp.lt.s32.totalorder %v377, 113
      %v912 = vsel %vm911, %v904, %v908
      %v913 = vsel %vm911, %v906, %v910
      %v914 = vsel %vm911, %v908, %v904
      %v915 = vsel %vm911, %v910, %v906
      %v916 = vlaneseq
      %v917 = vshrl.u32 %v916, 7
      %v918 = vsub.s32 1, %v917
      %v919 = vrot.slane %v366, %v918
      %v920 = vlaneseq
      %v921 = vshrl.u32 %v920, 7
      %v922 = vsub.s32 1, %v921
      %v923 = vrot.slane %v367, %v922
      %v924 = vmul.f32 %v912, %v919
      %v925 = vmul.f32 %v914, %v923
      %v926 = vmul.f32 %v913, %v919
      %v927 = vmul.f32 %v915, %v923
      %928 = vset.pattern.permute.xlu0 6
      %929 = vperm.xlu0 %928, %v685
      %v930 = vpop.permute.xlu0 %929
      %932 = vset.pattern.permute.xlu0 6
      %933 = vperm.xlu0 %932, %v686
      %v934 = vpop.permute.xlu0 %933
      %v936 = vmul.f32 %v924, %v930
      %v937 = vmul.f32 %v925, %v930
      %v938 = vmul.f32 %v926, %v934
      %v939 = vmul.f32 %v927, %v934
      %v940 = vadd.f32 %v899, %v936
      %v941 = vadd.f32 %v900, %v937
      %v942 = vadd.f32 %v901, %v938
      %v943 = vadd.f32 %v902, %v939
      %944 = vrot.lane.b32.xlu0 %v681, 112
      %v945 = vpop.permute.xlu0 %944
      %946 = vrot.lane.b32.xlu0 %v683, 112
      %v947 = vpop.permute.xlu0 %946
      %948 = vrot.lane.b32.xlu0 %v682, 112
      %v949 = vpop.permute.xlu0 %948
      %950 = vrot.lane.b32.xlu0 %v684, 112
      %v951 = vpop.permute.xlu0 %950
      %vm952 = vcmp.lt.s32.totalorder %v377, 112
      %v953 = vsel %vm952, %v945, %v949
      %v954 = vsel %vm952, %v947, %v951
      %v955 = vsel %vm952, %v949, %v945
      %v956 = vsel %vm952, %v951, %v947
      %v957 = vlaneseq
      %v958 = vshrl.u32 %v957, 7
      %v959 = vsub.s32 2, %v958
      %v960 = vrot.slane %v366, %v959
      %v961 = vlaneseq
      %v962 = vshrl.u32 %v961, 7
      %v963 = vsub.s32 2, %v962
      %v964 = vrot.slane %v367, %v963
      %v965 = vmul.f32 %v953, %v960
      %v966 = vmul.f32 %v955, %v964
      %v967 = vmul.f32 %v954, %v960
      %v968 = vmul.f32 %v956, %v964
      %969 = vset.pattern.permute.xlu0 7
      %970 = vperm.xlu0 %969, %v685
      %v971 = vpop.permute.xlu0 %970
      %973 = vset.pattern.permute.xlu0 7
      %974 = vperm.xlu0 %973, %v686
      %v975 = vpop.permute.xlu0 %974
      %v977 = vmul.f32 %v965, %v971
      %v978 = vmul.f32 %v966, %v971
      %v979 = vmul.f32 %v967, %v975
      %v980 = vmul.f32 %v968, %v975
      %v981 = vadd.f32 %v940, %v977
      %v982 = vadd.f32 %v941, %v978
      %v983 = vadd.f32 %v942, %v979
      %v984 = vadd.f32 %v943, %v980
      %985 = vrot.lane.b32.xlu0 %v681, 111
      %v986 = vpop.permute.xlu0 %985
      %987 = vrot.lane.b32.xlu0 %v683, 111
      %v988 = vpop.permute.xlu0 %987
      %989 = vrot.lane.b32.xlu0 %v682, 111
      %v990 = vpop.permute.xlu0 %989
      %991 = vrot.lane.b32.xlu0 %v684, 111
      %v992 = vpop.permute.xlu0 %991
      %vm993 = vcmp.lt.s32.totalorder %v377, 111
      %v994 = vsel %vm993, %v986, %v990
      %v995 = vsel %vm993, %v988, %v992
      %v996 = vsel %vm993, %v990, %v986
      %v997 = vsel %vm993, %v992, %v988
      %v998 = vlaneseq
      %v999 = vshrl.u32 %v998, 7
      %v1000 = vsub.s32 3, %v999
      %v1001 = vrot.slane %v366, %v1000
      %v1002 = vlaneseq
      %v1003 = vshrl.u32 %v1002, 7
      %v1004 = vsub.s32 3, %v1003
      %v1005 = vrot.slane %v367, %v1004
      %v1006 = vmul.f32 %v994, %v1001
      %v1007 = vmul.f32 %v996, %v1005
      %v1008 = vmul.f32 %v995, %v1001
      %v1009 = vmul.f32 %v997, %v1005
      %1010 = vset.pattern.permute.xlu0 8
      %1011 = vperm.xlu0 %1010, %v685
      %v1012 = vpop.permute.xlu0 %1011
      %1014 = vset.pattern.permute.xlu0 8
      %1015 = vperm.xlu0 %1014, %v686
      %v1016 = vpop.permute.xlu0 %1015
      %v1018 = vmul.f32 %v1006, %v1012
      %v1019 = vmul.f32 %v1007, %v1012
      %v1020 = vmul.f32 %v1008, %v1016
      %v1021 = vmul.f32 %v1009, %v1016
      %v1022 = vadd.f32 %v981, %v1018
      %v1023 = vadd.f32 %v982, %v1019
      %v1024 = vadd.f32 %v983, %v1020
      %v1025 = vadd.f32 %v984, %v1021
      %v1026 = vld [vmem:[%s7] sm:$0xff]
      %v1027 = vld [vmem:[%s7 + $0x8] sm:$0xff]
      %1029 = vset.pattern.permute.xlu0 0
      %1030 = vperm.xlu0 %1029, %v1026
      %v1031 = vpop.permute.xlu0 %1030
      %1034 = vset.pattern.permute.xlu0 0
      %1035 = vperm.xlu0 %1034, %v1027
      %v1036 = vpop.permute.xlu0 %1035
      %v1038 = vadd.f32 %v1022, %v1031
      %v1039 = vadd.f32 %v1023, %v1031
      %v1040 = vadd.f32 %v1024, %v1036
      %v1041 = vadd.f32 %v1025, %v1036
      %v1042 = vld [vmem:[%s8] sm:$0xff]
      %v1043 = vld [vmem:[%s8 + $0x8] sm:$0xff]
      %v1044 = vld [vmem:[%s8 + $0x10] sm:$0xff]
      %v1045 = vld [vmem:[%s8 + $0x18] sm:$0xff]
      %v1046 = vld [vmem:[%s9] sm:$0xff]
      %v1047 = vld [vmem:[%s9 + $0x8] sm:$0xff]
      %v1048 = vld [vmem:[%s9 + $0x10] sm:$0xff]
      %v1049 = vld [vmem:[%s9 + $0x18] sm:$0xff]
      %1051 = vset.pattern.permute.xlu0 0
      %1052 = vperm.xlu0 %1051, %v1046
      %v1053 = vpop.permute.xlu0 %1052
      %1056 = vset.pattern.permute.xlu0 0
      %1057 = vperm.xlu0 %1056, %v1047
      %v1058 = vpop.permute.xlu0 %1057
      %1061 = vset.pattern.permute.xlu0 0
      %1062 = vperm.xlu0 %1061, %v1048
      %v1063 = vpop.permute.xlu0 %1062
      %1066 = vset.pattern.permute.xlu0 0
      %1067 = vperm.xlu0 %1066, %v1049
      %v1068 = vpop.permute.xlu0 %1067
      %vm1070 = vcmask 261120
      %v1072 = vsel %vm1070, %v1042, 0
      %v1075 = vsel %vm1070, %v1043, 0
      %v1078 = vsel %vm1070, %v1044, 0
      %v1081 = vsel %vm1070, %v1045, 0
      %1083 = vmatprep.subr.mxu0 %v1039
      %1084 = vmatpush1.msra.mxu0 %v1038
      %1085 = vmatprep.subr.mxu0 %v1041
      %1086 = vmatpush1.msra.mxu0 %v1040
      %1087 = vmatprep.subr.mxu0 %v576
      %1088 = vmatpush1.msra.mxu0 %v575
      %1089 = vmatprep.subr.mxu0 %v578
      %1090 = vmatpush1.msra.mxu0 %v577
      %1091 = vmatprep.subr.mxu0 0.0
      %1092 = vmatpush1.msra.mxu0 0.0
      %1093 = vmatprep.subr.mxu0 0.0
      %1094 = vmatpush1.msra.mxu0 0.0
      %1095 = vmatprep.subr.mxu0 0.0
      %1096 = vmatpush1.msra.mxu0 0.0
      %1097 = vmatprep.subr.mxu0 0.0
      %1098 = vmatpush1.msra.mxu0 0.0
      %1099 = vmatprep.subr.mxu0 0.0
      %1100 = vmatpush1.msra.mxu0 0.0
      %1101 = vmatprep.subr.mxu0 0.0
      %1102 = vmatpush1.msra.mxu0 0.0
      %1103 = vmatprep.subr.mxu0 0.0
      %1104 = vmatpush1.msra.mxu0 0.0
      %1105 = vmatprep.subr.mxu0 0.0
      %1106 = vmatpush1.msra.mxu0 0.0
      %1107 = vmatprep.subr.mxu0 0.0
      %1108 = vmatpush1.msra.mxu0 0.0
      %1109 = vmatprep.subr.mxu0 0.0
      %1110 = vmatpush1.msra.mxu0 0.0
      %1111 = vmatprep.subr.mxu0 0.0
      %1112 = vmatpush1.msra.mxu0 0.0
      %1113 = vmatprep.subr.mxu0 0.0
      %1114 = vmatpush1.msra.mxu0 0.0
      %1115 = vmatprep.subr.mxu0 0.0
      %1116 = vmatpush1.msra.mxu0 0.0
      %1117 = vmatprep.subr.mxu0 0.0
      %1118 = vmatpush1.msra.mxu0 0.0
      %1119 = vmatprep.subr.mxu0 0.0
      %1120 = vmatpush1.msra.mxu0 0.0
      %1121 = vmatprep.subr.mxu0 0.0
      %1122 = vmatpush1.msra.mxu0 0.0
      %1123 = vmatprep.subr.mxu0 0.0
      %1124 = vmatpush1.msra.mxu0 0.0
      %1125 = vmatprep.subr.mxu0 0.0
      %1126 = vmatpush1.msra.mxu0 0.0
      %1127 = vmatprep.subr.mxu0 0.0
      %1128 = vmatpush1.msra.mxu0 0.0
      %1129 = vmatprep.subr.mxu0 0.0
      %1130 = vmatpush1.msra.mxu0 0.0
      %1131 = vmatprep.subr.mxu0 0.0
      %1132 = vmatpush1.msra.mxu0 0.0
      %1133 = vmatprep.subr.mxu0 0.0
      %1134 = vmatpush1.msra.mxu0 0.0
      %1135 = vmatprep.subr.mxu0 0.0
      %1136 = vmatpush1.msra.mxu0 0.0
      %1137 = vmatprep.subr.mxu0 0.0
      %1138 = vmatpush1.msra.mxu0 0.0
      %1139 = vmatprep.subr.mxu0 0.0
      %1140 = vmatpush1.msra.mxu0 0.0
      %1141 = vmatprep.subr.mxu0 0.0
      %1142 = vmatpush1.msra.mxu0 0.0
      %1143 = vmatprep.subr.mxu0 0.0
      %1144 = vmatpush1.msra.mxu0 0.0
      %1145 = vmatprep.subr.mxu0 0.0
      %1146 = vmatpush1.msra.mxu0 0.0
      %1147 = vmatprep.mubr.f32.mxu0 0.0
      %1148 = vmatmul.mubr.f32.gmra.mrb[0].mxu0 %v1072
      %v1149 = vpop.f32.mrb[0].mxu0
      %v1150 = vadd.f32 %v1053, %v1149
      %v1151 = vpop.f32.mrb[0].mxu0
      %v1152 = vadd.f32 %v1053, %v1151
      %1153 = vmatprep.mubr.f32.mxu0 0.0
      %1154 = vmatmul.mubr.f32.gmra.mrb[0].mxu0 %v1075
      %v1155 = vpop.f32.mrb[0].mxu0
      %v1156 = vadd.f32 %v1058, %v1155
      %v1157 = vpop.f32.mrb[0].mxu0
      %v1158 = vadd.f32 %v1058, %v1157
      %1159 = vmatprep.mubr.f32.mxu0 0.0
      %1160 = vmatmul.mubr.f32.gmra.mrb[0].mxu0 %v1078
      %v1161 = vpop.f32.mrb[0].mxu0
      %v1162 = vadd.f32 %v1063, %v1161
      %v1163 = vpop.f32.mrb[0].mxu0
      %v1164 = vadd.f32 %v1063, %v1163
      %1165 = vmatprep.mubr.f32.mxu0 0.0
      %1166 = vmatmul.mubr.f32.gmra.mrb[0].mxu0 %v1081
      %v1167 = vpop.f32.mrb[0].mxu0
      %v1168 = vadd.f32 %v1068, %v1167
      %v1169 = vpop.f32.mrb[0].mxu0
      %v1170 = vadd.f32 %v1068, %v1169
      %1171 = vdwg.mxu0
      %v1172 = vmax.f32 %v1150, 0.0
      %v1173 = vmax.f32 %v1152, 0.0
      %v1174 = vmax.f32 %v1156, 0.0
      %v1175 = vmax.f32 %v1158, 0.0
      %v1176 = vmax.f32 %v1162, 0.0
      %v1177 = vmax.f32 %v1164, 0.0
      %v1178 = vmax.f32 %v1168, 0.0
      %v1179 = vmax.f32 %v1170, 0.0
      %1180 = vst [vmem:[%s359] sm:$0xff] %v1172
      %1181 = vst [vmem:[%s359 + $0x8] sm:$0xff] %v1173
      %1182 = vst [vmem:[%s359 + $0x10] sm:$0xff] %v1174
      %1183 = vst [vmem:[%s359 + $0x18] sm:$0xff] %v1175
      %1184 = vst [vmem:[%s359 + $0x20] sm:$0xff] %v1176
      %1185 = vst [vmem:[%s359 + $0x28] sm:$0xff] %v1177
      %1186 = vst [vmem:[%s359 + $0x30] sm:$0xff] %v1178
      %1187 = vst [vmem:[%s359 + $0x38] sm:$0xff] %v1179
      %p1188 = scmp.lt.s32.totalorder %s21, 1
      %s1189 = scalar_select %p1188, %s21, 1
      %s1190 = smul.addr %s1189, 8
      %s1191 = smul.addr %s1190, 8
      %s1192 = scalar_lea.vmem %s10, %s1191
      // Predicated region
      $region61: #{stem_forward.1} parent=59 // pred_check
        %p1193 = pneg %p254
      $region62: #{stem_forward.1} parent=59 // pred_check_branch
        %1195 = sbr.rel (%p1193) target = $region64
      $region63: #{stem_forward.1} parent=59 // pred_region
        _
      $region64: #{stem_forward.1} parent=59 // pred_fallthru
        _
    $region60: #{stem_forward.1} parent=5 // pred_fallthru
      _
    %p1196 = scmp.le.s32.totalorder 2, %s16
    // Predicated region
    $region65: #{stem_forward.1} parent=5 // pred_check
      %p1197 = pneg %p1196
    $region66: #{stem_forward.1} parent=5 // pred_check_branch
      %1199 = sbr.rel (%p1197) target = $region68
    $region67: #{stem_forward.1} parent=5 // pred_region
      %s1200 = ssub.s32 %s16, 2
      // Predicated region
      $region69: #{stem_forward.1} parent=67 // pred_check
        %p1201 = pneg %p260
      $region70: #{stem_forward.1} parent=67 // pred_check_branch
        %1203 = sbr.rel (%p1201) target = $region72
      $region71: #{stem_forward.1} parent=67 // pred_region
        %p1204 = scmp.lt.s32.totalorder %s22, 1
        %s1205 = scalar_select %p1204, %s22, 1
        %s1206 = smul.addr %s1205, 8
        %s1207 = smul.addr %s1206, 8
        %s1208 = scalar_lea.vmem %s10, %s1207
      $region72: #{stem_forward.1} parent=67 // pred_fallthru
        _
    $region68: #{stem_forward.1} parent=5 // pred_fallthru
      _
  $region6: #{stem_forward.1} parent=0 // loop_footer
    %s20 = sadd.s32 1, %s16
  $region7: #{stem_forward.1} parent=0 // loop_footer_branch
    %15 = sbr.rel target = $region3
  $region8: #{stem_forward.1} parent=0 // loop_exit
    _

</llo_original>
